<compile_context>
chip_gen: v6e
topology: v6e:2x2x1
jax: 0.10.0
libtpu: 0.0.40
codegen_flags: <defaults>
</compile_context>

<pallas_src>
import functools
import math

import jax
import jax.numpy as jnp
from jax.experimental import pallas as pl
from jax.experimental.pallas import tpu as pltpu


# --------------------------------------------------------------------------------------
# Weight preprocessing (tiny, pure JAX): polyphase / transposed-conv decomposition.
# --------------------------------------------------------------------------------------
def _build_polyphase_weights(w, padding, compute_dtype):
    """Combine Conv1d taps into per-output-phase effective weights.

    For nearest-2x upsample followed by Conv1d(stride=1, padding=p):
        y[:, 2t + ph] = sum_d W_eff[ph, d] @ x[:, t + d]      (x zero outside [0, L))
    Returns W of shape (2*C_out, Kp): row = ph*C_out + c_out, col = d_idx*C_in + c_in,
    zero-padded along the contraction dim to a sublane-pack-aligned Kp.
    """
    C_out, C_in, K = w.shape
    offs = [(ph + k - padding) // 2 for ph in (0, 1) for k in range(K)]
    d_min, d_max = min(offs), max(offs)
    D = d_max - d_min + 1

    w_eff = jnp.zeros((2, D, C_out, C_in), jnp.float32)
    for ph in range(2):
        for k in range(K):
            d = (ph + k - padding) // 2
            w_eff = w_eff.at[ph, d - d_min].add(w[:, :, k].astype(jnp.float32))

    w_mat = jnp.transpose(w_eff, (0, 2, 1, 3)).reshape(2 * C_out, D * C_in)

    pack = 8 if compute_dtype == jnp.float32 else 16
    K_raw = D * C_in
    Kp = -(-K_raw // pack) * pack
    if Kp > K_raw:
        w_mat = jnp.pad(w_mat, ((0, 0), (0, Kp - K_raw)))
    return w_mat.astype(compute_dtype), d_min, D, Kp


# --------------------------------------------------------------------------------------
# Kernel bodies.
# --------------------------------------------------------------------------------------
def _stage_and_matmul(x_ref, w_ref, b_ref, xcol_ref, *, N_b, C_in, L, T, D, d_min,
                      K_raw, Kp, do_nl, compute_dtype):
    """im2col-stage the batch block and run one fused MXU matmul.

    Returns the (2*C_out, N_b*T) f32 result: rows [0:C_out] are the even output
    samples, rows [C_out:2*C_out] the odd ones (bias and LeakyReLU already applied).
    """
    # Stage the D shifted windows straight from the raw x block (no padded copy):
    # row block j holds x[:, t + d_min + j]; columns mapping outside [0, L) are zero.
    # Halo zeros are tiny (<= ceil(K/2) columns per window) and re-written each step,
    # so correctness does not depend on scratch persistence / core assignment.
    for bb in range(N_b):
        base = bb * T
        xb = x_ref[bb].astype(compute_dtype)                 # (C_in, L)
        for j in range(D):
            d = d_min + j
            lo, hi = max(0, d), min(L, d + T)
            dst_lo, dst_hi = lo - d, hi - d
            rows = slice(j * C_in, (j + 1) * C_in)
            if dst_lo > 0:
                xcol_ref[rows, base:base + dst_lo] = jnp.zeros(
                    (C_in, dst_lo), compute_dtype)
            if dst_hi < T:
                xcol_ref[rows, base + dst_hi:base + T] = jnp.zeros(
                    (C_in, T - dst_hi), compute_dtype)
            if hi > lo:
                xcol_ref[rows, base + dst_lo:base + dst_hi] = xb[:, lo:hi]
    if Kp > K_raw:                                           # alignment-pad rows
        xcol_ref[K_raw:Kp, :] = jnp.zeros((Kp - K_raw, N_b * T), compute_dtype)

    # One MXU push for the whole batch block; f32 accumulation, exact f32 bias add.
    res = jnp.dot(w_ref[...], xcol_ref[...], preferred_element_type=jnp.float32)
    res = res + b_ref[...]
    if do_nl:
        res = jnp.where(res >= 0.0, res, 0.2 * res)          # LeakyReLU(0.2)
    return res


def _upsample_conv_kernel_fused(x_ref, w_ref, b_ref, o_ref, xcol_ref, *, N_b, C_in,
                                C_out, L, L_out, T, D, d_min, K_raw, Kp, do_nl,
                                compute_dtype):
    res = _stage_and_matmul(x_ref, w_ref, b_ref, xcol_ref, N_b=N_b, C_in=C_in, L=L,
                            T=T, D=D, d_min=d_min, K_raw=K_raw, Kp=Kp, do_nl=do_nl,
                            compute_dtype=compute_dtype)
    for bb in range(N_b):
        even = res[:C_out, bb * T:(bb + 1) * T]
        odd = res[C_out:2 * C_out, bb * T:(bb + 1) * T]
        # Interleave even/odd samples along lanes: (C_out, T, 2) -> (C_out, 2T).
        y = jnp.stack([even, odd], axis=-1).reshape(C_out, 2 * T)
        o_ref[bb] = y[:, :L_out].astype(o_ref.dtype)


def _upsample_conv_kernel_phase(x_ref, w_ref, b_ref, o_ref, xcol_ref, *, N_b, C_in,
                                C_out, L, L_out, T, D, d_min, K_raw, Kp, do_nl,
                                compute_dtype):
    del L_out  # interleave happens outside the kernel on this fallback path
    res = _stage_and_matmul(x_ref, w_ref, b_ref, xcol_ref, N_b=N_b, C_in=C_in, L=L,
                            T=T, D=D, d_min=d_min, K_raw=K_raw, Kp=Kp, do_nl=do_nl,
                            compute_dtype=compute_dtype)
    for bb in range(N_b):
        o_ref[bb, :, 0:T] = res[:C_out, bb * T:(bb + 1) * T].astype(o_ref.dtype)
        o_ref[bb, :, T:2 * T] = res[C_out:2 * C_out, bb * T:(bb + 1) * T].astype(o_ref.dtype)


# --------------------------------------------------------------------------------------
# One-time probe: does this Mosaic build support the in-kernel minor-dim interleave?
# --------------------------------------------------------------------------------------
@functools.cache
def _kernel_interleave_ok(c, t):
    def probe(a_ref, b_ref, o_ref):
        o_ref[...] = jnp.stack([a_ref[...], b_ref[...]], axis=-1).reshape(o_ref.shape)

    ok = False
    try:
        a = jnp.arange(c * t, dtype=jnp.float32).reshape(c, t)
        b = a + 65536.0
        out = pl.pallas_call(
            probe, out_shape=jax.ShapeDtypeStruct((c, 2 * t), jnp.float32))(a, b)
        ref = jnp.stack([a, b], axis=-1).reshape(c, 2 * t)
        ok = bool(jnp.array_equal(jax.block_until_ready(out), ref))
    except Exception:  # pragma: no cover - older Mosaic builds
        ok = False
    if not ok:
        print("upsampling_block: in-kernel interleave unsupported on this build; "
              "using phase-blocked output + XLA interleave fallback")
    return ok


# --------------------------------------------------------------------------------------
# Batch-block sizing.
# --------------------------------------------------------------------------------------
def _choose_batch_block(N, C_in, L, C_out, L_out, T, Kp, io_bytes, c_bytes):
    # >= 256 lanes per step amortizes the ~0.35 us per-step overhead and makes the
    # matmul-result stores / output DMAs full-lane.
    nb = min(N, max(1, -(-256 // T)))

    # VMEM: double-buffered I/O blocks + im2col slab; stay well under the smallest
    # scoped-VMEM budget (v7x: 64 MiB physical / 32 MiB scoped default).
    def step_bytes(n):
        return 2 * n * (C_in * L + C_out * L_out) * io_bytes + Kp * n * T * c_bytes

    while nb > 1 and step_bytes(nb) > 8 * 2 ** 20:
        nb -= 1
    if N > 1:                        # keep >= 2 grid steps so v7x can use both TCs
        nb = min(nb, -(-N // 2))
    while N % nb:                    # avoid ragged edge blocks
        nb -= 1
    return nb


# --------------------------------------------------------------------------------------
# Public wrapper.
# --------------------------------------------------------------------------------------
def upsampling_block(x, w, b, *, stride=1, padding=1, do_nl=True,
                     compute_dtype=jnp.bfloat16):
    """Forward pass of UpsamplingBlock: Upsample(2x, nearest) -> Conv1d -> LeakyReLU(0.2).

    x : (N, C_in, L) ; w : (C_out, C_in, K) ; b : (C_out,)
    """
    if stride != 1:
        # TODO(synk): stride != 1 needs a different phase decomposition; the archived
        # experiment only uses stride=1.
        raise NotImplementedError("upsampling_block currently supports stride=1 only")

    N, C_in, L = x.shape
    C_out, C_in_w, K = w.shape
    assert C_in_w == C_in, (C_in_w, C_in)

    L_out = 2 * L + 2 * padding - K + 1            # conv output length over upsampled x
    T = -(-L_out // 2)                             # per-phase output length (ceil)
    w_all, d_min, D, Kp = _build_polyphase_weights(w, padding, compute_dtype)
    K_raw = D * C_in
    b2 = jnp.concatenate([b, b]).astype(jnp.float32).reshape(2 * C_out, 1)

    N_b = _choose_batch_block(N, C_in, L, C_out, L_out, T, Kp,
                              jnp.dtype(x.dtype).itemsize,
                              jnp.dtype(compute_dtype).itemsize)
    grid = (N // N_b,)

    static = dict(N_b=N_b, C_in=C_in, C_out=C_out, L=L, L_out=L_out, T=T, D=D,
                  d_min=d_min, K_raw=K_raw, Kp=Kp, do_nl=do_nl,
                  compute_dtype=compute_dtype)
    in_specs = [
        pl.BlockSpec((N_b, C_in, L), lambda i: (i, 0, 0)),          # raw x block
        pl.BlockSpec((2 * C_out, Kp), lambda i: (0, 0)),            # packed weights
        pl.BlockSpec((2 * C_out, 1), lambda i: (0, 0)),             # f32 bias (2 phases)
    ]
    scratch_shapes = [pltpu.VMEM((Kp, N_b * T), compute_dtype)]     # im2col slab
    cparams = pltpu.CompilerParams(dimension_semantics=("parallel",))

    if _kernel_interleave_ok(C_out, T):
        kernel = functools.partial(_upsample_conv_kernel_fused, **static)
        return pl.pallas_call(
            kernel,
            out_shape=jax.ShapeDtypeStruct((N, C_out, L_out), x.dtype),
            grid=grid,
            in_specs=in_specs,
            out_specs=pl.BlockSpec((N_b, C_out, L_out), lambda i: (i, 0, 0)),
            scratch_shapes=scratch_shapes,
            compiler_params=cparams,
        )(x, w_all, b2)

    # Fallback: one lane-dense phase-blocked output (even | odd), interleave in XLA.
    kernel = functools.partial(_upsample_conv_kernel_phase, **static)
    y = pl.pallas_call(
        kernel,
        out_shape=jax.ShapeDtypeStruct((N, C_out, 2 * T), x.dtype),
        grid=grid,
        in_specs=in_specs,
        out_specs=pl.BlockSpec((N_b, C_out, 2 * T), lambda i: (i, 0, 0)),
        scratch_shapes=scratch_shapes,
        compiler_params=cparams,
    )(x, w_all, b2)
    y = jnp.stack([y[..., :T], y[..., T:]], axis=-1).reshape(N, C_out, 2 * T)
    return y[..., :L_out]


# --------------------------------------------------------------------------------------
# Self-test.
# --------------------------------------------------------------------------------------
if __name__ == "__main__":
    # Shapes representative of the module's use in the experiment's generator
    # (channels halve while length doubles): Conv1d(in=16, out=8, k=3, s=1, p=1).
    # N=8 exercises batch blocking (N_b=4) with a 2-step grid.
    N, C_in, C_out, L = 8, 16, 8, 64
    K, stride, padding = 3, 1, 1

    key = jax.random.PRNGKey(0)
    k_x, k_w, k_b = jax.random.split(key, 3)
    x = jax.random.normal(k_x, (N, C_in, L), dtype=jnp.float32)

    # PyTorch-style init: U(-1/sqrt(fan_in), 1/sqrt(fan_in))
    bound = 1.0 / math.sqrt(C_in * K)
    w = jax.random.uniform(k_w, (C_out, C_in, K), jnp.float32, -bound, bound)
    b = jax.random.uniform(k_b, (C_out,), jnp.float32, -bound, bound)

    # Pure-JAX reference (nearest upsample -> conv1d -> bias -> LeakyReLU), f32.
    x_up = jnp.repeat(x, 2, axis=-1)
    ref = jax.lax.conv_general_dilated(
        x_up, w, (stride,), [(padding, padding)],
        dimension_numbers=("NCH", "OIH", "NCH"),
        precision=jax.lax.Precision.HIGHEST,
    )
    ref = ref + b[None, :, None]
    ref = jnp.where(ref >= 0.0, ref, 0.2 * ref)

    # Exactness check: f32 compute path.
    out_f32 = jax.block_until_ready(
        upsampling_block(x, w, b, stride=stride, padding=padding, do_nl=True,
                         compute_dtype=jnp.float32))
    assert out_f32.shape == ref.shape, (out_f32.shape, ref.shape)
    assert jnp.allclose(out_f32, ref, atol=5e-5, rtol=5e-5), "f32 path mismatch"

    # Default bf16-MXU path (f32 accumulation, exact f32 bias): loose tolerance.
    out_bf16 = jax.block_until_ready(
        upsampling_block(x, w, b, stride=stride, padding=padding, do_nl=True))
    assert out_bf16.shape == ref.shape, (out_bf16.shape, ref.shape)
    assert jnp.allclose(out_bf16, ref, atol=5e-2, rtol=5e-2), "bf16 path mismatch"

    print("KERNEL_OK")
</pallas_src>

<mosaic_0001>
module attributes {stable_mosaic.version = 11 : i64} {
  func.func @probe(%arg0: memref<8x64xf32, #tpu.memory_space<vmem>>, %arg1: memref<8x64xf32, #tpu.memory_space<vmem>>, %arg2: memref<8x128xf32, #tpu.memory_space<vmem>>) attributes {dimension_semantics = [], scalar_prefetch = 0 : i64, scratch_operands = 0 : i64, tpu.core_type = #tpu.core_type<tc>} {
    %c0 = arith.constant 0 : index
    %c0_0 = arith.constant 0 : index
    %0 = vector.load %arg0[%c0, %c0_0] : memref<8x64xf32, #tpu.memory_space<vmem>>, vector<8x64xf32>
    %c0_1 = arith.constant 0 : index
    %c0_2 = arith.constant 0 : index
    %1 = vector.load %arg1[%c0_1, %c0_2] : memref<8x64xf32, #tpu.memory_space<vmem>>, vector<8x64xf32>
    %2 = vector.shape_cast %0 : vector<8x64xf32> to vector<8x64x1xf32>
    %3 = vector.shape_cast %1 : vector<8x64xf32> to vector<8x64x1xf32>
    %4 = tpu.concatenate %2, %3 in 2 : vector<8x64x1xf32>, vector<8x64x1xf32> -> vector<8x64x2xf32>
    %5 = vector.shape_cast %4 : vector<8x64x2xf32> to vector<8x128xf32>
    %c0_3 = arith.constant 0 : index
    %c0_4 = arith.constant 0 : index
    %6 = vector.load %arg2[%c0_3, %c0_4] : memref<8x128xf32, #tpu.memory_space<vmem>>, vector<8x128xf32>
    tpu.vector_store %arg2[%c0_3, %c0_4], %5 {strides = array<i32>} : memref<8x128xf32, #tpu.memory_space<vmem>>, vector<8x128xf32>,
    return
  }
}

module attributes {stable_mosaic.version = 11 : i64} {
  func.func @_upsample_conv_kernel_phase(%arg0: i32, %arg1: memref<4x16x64xf32, #tpu.memory_space<vmem>>, %arg2: memref<16x48xf32, #tpu.memory_space<vmem>>, %arg3: memref<16x1xf32, #tpu.memory_space<vmem>>, %arg4: memref<4x8x128xf32, #tpu.memory_space<vmem>>, %arg5: memref<48x256xf32, #tpu.memory_space<vmem>>) attributes {dimension_semantics = [#tpu.dimension_semantics<parallel>], iteration_bounds = array<i64: 2>, scalar_prefetch = 0 : i64, scratch_operands = 1 : i64, tpu.core_type = #tpu.core_type<tc>, window_params = [{transform_indices = @transform_0, window_bounds = array<i64: 4, 16, 64>}, {pipeline_mode = #tpu.pipeline_mode<synchronous>, transform_indices = @transform_1, window_bounds = array<i64: 16, 48>}, {pipeline_mode = #tpu.pipeline_mode<synchronous>, transform_indices = @transform_2, window_bounds = array<i64: 16, 1>}, {transform_indices = @transform_3, window_bounds = array<i64: 4, 8, 128>}]} {
    %c0 = arith.constant 0 : index
    %c0_0 = arith.constant 0 : index
    %c0_1 = arith.constant 0 : index
    %0 = vector.load %arg1[%c0, %c0_0, %c0_1] : memref<4x16x64xf32, #tpu.memory_space<vmem>>, vector<1x16x64xf32>
    %1 = vector.shape_cast %0 : vector<1x16x64xf32> to vector<16x64xf32>
    %cst = arith.constant 0.000000e+00 : f32
    %2 = vector.broadcast %cst : f32 to vector<16x1xf32>
    %c0_2 = arith.constant 0 : index
    %c0_3 = arith.constant 0 : index
    %3 = vector.load %arg5[%c0_2, %c0_3] : memref<48x256xf32, #tpu.memory_space<vmem>>, vector<16x1xf32>
    tpu.vector_store %arg5[%c0_2, %c0_3], %2 {strides = array<i32>} : memref<48x256xf32, #tpu.memory_space<vmem>>, vector<16x1xf32>,
    %4 = vector.extract_strided_slice %1 {offsets = [0, 0], sizes = [16, 63], strides = [1, 1]} : vector<16x64xf32> to vector<16x63xf32>
    %c0_4 = arith.constant 0 : index
    %c1 = arith.constant 1 : index
    %5 = vector.load %arg5[%c0_4, %c1] : memref<48x256xf32, #tpu.memory_space<vmem>>, vector<16x63xf32>
    tpu.vector_store %arg5[%c0_4, %c1], %4 {strides = array<i32>} : memref<48x256xf32, #tpu.memory_space<vmem>>, vector<16x63xf32>,
    %c16 = arith.constant 16 : index
    %c0_5 = arith.constant 0 : index
    %6 = vector.load %arg5[%c16, %c0_5] : memref<48x256xf32, #tpu.memory_space<vmem>>, vector<16x64xf32>
    tpu.vector_store %arg5[%c16, %c0_5], %1 {strides = array<i32>} : memref<48x256xf32, #tpu.memory_space<vmem>>, vector<16x64xf32>,
    %cst_6 = arith.constant 0.000000e+00 : f32
    %7 = vector.broadcast %cst_6 : f32 to vector<16x1xf32>
    %c32 = arith.constant 32 : index
    %c63 = arith.constant 63 : index
    %8 = vector.load %arg5[%c32, %c63] : memref<48x256xf32, #tpu.memory_space<vmem>>, vector<16x1xf32>
    tpu.vector_store %arg5[%c32, %c63], %7 {strides = array<i32>} : memref<48x256xf32, #tpu.memory_space<vmem>>, vector<16x1xf32>,
    %9 = vector.extract_strided_slice %1 {offsets = [0, 1], sizes = [16, 63], strides = [1, 1]} : vector<16x64xf32> to vector<16x63xf32>
    %c32_7 = arith.constant 32 : index
    %c0_8 = arith.constant 0 : index
    %10 = vector.load %arg5[%c32_7, %c0_8] : memref<48x256xf32, #tpu.memory_space<vmem>>, vector<16x63xf32>
    tpu.vector_store %arg5[%c32_7, %c0_8], %9 {strides = array<i32>} : memref<48x256xf32, #tpu.memory_space<vmem>>, vector<16x63xf32>,
    %c1_9 = arith.constant 1 : index
    %c0_10 = arith.constant 0 : index
    %c0_11 = arith.constant 0 : index
    %11 = vector.load %arg1[%c1_9, %c0_10, %c0_11] : memref<4x16x64xf32, #tpu.memory_space<vmem>>, vector<1x16x64xf32>
    %12 = vector.shape_cast %11 : vector<1x16x64xf32> to vector<16x64xf32>
    %cst_12 = arith.constant 0.000000e+00 : f32
    %13 = vector.broadcast %cst_12 : f32 to vector<16x1xf32>
    %c0_13 = arith.constant 0 : index
    %c64 = arith.constant 64 : index
    %14 = vector.load %arg5[%c0_13, %c64] : memref<48x256xf32, #tpu.memory_space<vmem>>, vector<16x1xf32>
    tpu.vector_store %arg5[%c0_13, %c64], %13 {strides = array<i32>} : memref<48x256xf32, #tpu.memory_space<vmem>>, vector<16x1xf32>,
    %15 = vector.extract_strided_slice %12 {offsets = [0, 0], sizes = [16, 63], strides = [1, 1]} : vector<16x64xf32> to vector<16x63xf32>
    %c0_14 = arith.constant 0 : index
    %c65 = arith.constant 65 : index
    %16 = vector.load %arg5[%c0_14, %c65] : memref<48x256xf32, #tpu.memory_space<vmem>>, vector<16x63xf32>
    tpu.vector_store %arg5[%c0_14, %c65], %15 {strides = array<i32>} : memref<48x256xf32, #tpu.memory_space<vmem>>, vector<16x63xf32>,
    %c16_15 = arith.constant 16 : index
    %c64_16 = arith.constant 64 : index
    %17 = vector.load %arg5[%c16_15, %c64_16] : memref<48x256xf32, #tpu.memory_space<vmem>>, vector<16x64xf32>
    tpu.vector_store %arg5[%c16_15, %c64_16], %12 {strides = array<i32>} : memref<48x256xf32, #tpu.memory_space<vmem>>, vector<16x64xf32>,
    %cst_17 = arith.constant 0.000000e+00 : f32
    %18 = vector.broadcast %cst_17 : f32 to vector<16x1xf32>
    %c32_18 = arith.constant 32 : index
    %c127 = arith.constant 127 : index
    %19 = vector.load %arg5[%c32_18, %c127] : memref<48x256xf32, #tpu.memory_space<vmem>>, vector<16x1xf32>
    tpu.vector_store %arg5[%c32_18, %c127], %18 {strides = array<i32>} : memref<48x256xf32, #tpu.memory_space<vmem>>, vector<16x1xf32>,
    %20 = vector.extract_strided_slice %12 {offsets = [0, 1], sizes = [16, 63], strides = [1, 1]} : vector<16x64xf32> to vector<16x63xf32>
    %c32_19 = arith.constant 32 : index
    %c64_20 = arith.constant 64 : index
    %21 = vector.load %arg5[%c32_19, %c64_20] : memref<48x256xf32, #tpu.memory_space<vmem>>, vector<16x63xf32>
    tpu.vector_store %arg5[%c32_19, %c64_20], %20 {strides = array<i32>} : memref<48x256xf32, #tpu.memory_space<vmem>>, vector<16x63xf32>,
    %c2 = arith.constant 2 : index
    %c0_21 = arith.constant 0 : index
    %c0_22 = arith.constant 0 : index
    %22 = vector.load %arg1[%c2, %c0_21, %c0_22] : memref<4x16x64xf32, #tpu.memory_space<vmem>>, vector<1x16x64xf32>
    %23 = vector.shape_cast %22 : vector<1x16x64xf32> to vector<16x64xf32>
    %cst_23 = arith.constant 0.000000e+00 : f32
    %24 = vector.broadcast %cst_23 : f32 to vector<16x1xf32>
    %c0_24 = arith.constant 0 : index
    %c128 = arith.constant 128 : index
    %25 = vector.load %arg5[%c0_24, %c128] : memref<48x256xf32, #tpu.memory_space<vmem>>, vector<16x1xf32>
    tpu.vector_store %arg5[%c0_24, %c128], %24 {strides = array<i32>} : memref<48x256xf32, #tpu.memory_space<vmem>>, vector<16x1xf32>,
    %26 = vector.extract_strided_slice %23 {offsets = [0, 0], sizes = [16, 63], strides = [1, 1]} : vector<16x64xf32> to vector<16x63xf32>
    %c0_25 = arith.constant 0 : index
    %c129 = arith.constant 129 : index
    %27 = vector.load %arg5[%c0_25, %c129] : memref<48x256xf32, #tpu.memory_space<vmem>>, vector<16x63xf32>
    tpu.vector_store %arg5[%c0_25, %c129], %26 {strides = array<i32>} : memref<48x256xf32, #tpu.memory_space<vmem>>, vector<16x63xf32>,
    %c16_26 = arith.constant 16 : index
    %c128_27 = arith.constant 128 : index
    %28 = vector.load %arg5[%c16_26, %c128_27] : memref<48x256xf32, #tpu.memory_space<vmem>>, vector<16x64xf32>
    tpu.vector_store %arg5[%c16_26, %c128_27], %23 {strides = array<i32>} : memref<48x256xf32, #tpu.memory_space<vmem>>, vector<16x64xf32>,
    %cst_28 = arith.constant 0.000000e+00 : f32
    %29 = vector.broadcast %cst_28 : f32 to vector<16x1xf32>
    %c32_29 = arith.constant 32 : index
    %c191 = arith.constant 191 : index
    %30 = vector.load %arg5[%c32_29, %c191] : memref<48x256xf32, #tpu.memory_space<vmem>>, vector<16x1xf32>
    tpu.vector_store %arg5[%c32_29, %c191], %29 {strides = array<i32>} : memref<48x256xf32, #tpu.memory_space<vmem>>, vector<16x1xf32>,
    %31 = vector.extract_strided_slice %23 {offsets = [0, 1], sizes = [16, 63], strides = [1, 1]} : vector<16x64xf32> to vector<16x63xf32>
    %c32_30 = arith.constant 32 : index
    %c128_31 = arith.constant 128 : index
    %32 = vector.load %arg5[%c32_30, %c128_31] : memref<48x256xf32, #tpu.memory_space<vmem>>, vector<16x63xf32>
    tpu.vector_store %arg5[%c32_30, %c128_31], %31 {strides = array<i32>} : memref<48x256xf32, #tpu.memory_space<vmem>>, vector<16x63xf32>,
    %c3 = arith.constant 3 : index
    %c0_32 = arith.constant 0 : index
    %c0_33 = arith.constant 0 : index
    %33 = vector.load %arg1[%c3, %c0_32, %c0_33] : memref<4x16x64xf32, #tpu.memory_space<vmem>>, vector<1x16x64xf32>
    %34 = vector.shape_cast %33 : vector<1x16x64xf32> to vector<16x64xf32>
    %cst_34 = arith.constant 0.000000e+00 : f32
    %35 = vector.broadcast %cst_34 : f32 to vector<16x1xf32>
    %c0_35 = arith.constant 0 : index
    %c192 = arith.constant 192 : index
    %36 = vector.load %arg5[%c0_35, %c192] : memref<48x256xf32, #tpu.memory_space<vmem>>, vector<16x1xf32>
    tpu.vector_store %arg5[%c0_35, %c192], %35 {strides = array<i32>} : memref<48x256xf32, #tpu.memory_space<vmem>>, vector<16x1xf32>,
    %37 = vector.extract_strided_slice %34 {offsets = [0, 0], sizes = [16, 63], strides = [1, 1]} : vector<16x64xf32> to vector<16x63xf32>
    %c0_36 = arith.constant 0 : index
    %c193 = arith.constant 193 : index
    %38 = vector.load %arg5[%c0_36, %c193] : memref<48x256xf32, #tpu.memory_space<vmem>>, vector<16x63xf32>
    tpu.vector_store %arg5[%c0_36, %c193], %37 {strides = array<i32>} : memref<48x256xf32, #tpu.memory_space<vmem>>, vector<16x63xf32>,
    %c16_37 = arith.constant 16 : index
    %c192_38 = arith.constant 192 : index
    %39 = vector.load %arg5[%c16_37, %c192_38] : memref<48x256xf32, #tpu.memory_space<vmem>>, vector<16x64xf32>
    tpu.vector_store %arg5[%c16_37, %c192_38], %34 {strides = array<i32>} : memref<48x256xf32, #tpu.memory_space<vmem>>, vector<16x64xf32>,
    %cst_39 = arith.constant 0.000000e+00 : f32
    %40 = vector.broadcast %cst_39 : f32 to vector<16x1xf32>
    %c32_40 = arith.constant 32 : index
    %c255 = arith.constant 255 : index
    %41 = vector.load %arg5[%c32_40, %c255] : memref<48x256xf32, #tpu.memory_space<vmem>>, vector<16x1xf32>
    tpu.vector_store %arg5[%c32_40, %c255], %40 {strides = array<i32>} : memref<48x256xf32, #tpu.memory_space<vmem>>, vector<16x1xf32>,
    %42 = vector.extract_strided_slice %34 {offsets = [0, 1], sizes = [16, 63], strides = [1, 1]} : vector<16x64xf32> to vector<16x63xf32>
    %c32_41 = arith.constant 32 : index
    %c192_42 = arith.constant 192 : index
    %43 = vector.load %arg5[%c32_41, %c192_42] : memref<48x256xf32, #tpu.memory_space<vmem>>, vector<16x63xf32>
    tpu.vector_store %arg5[%c32_41, %c192_42], %42 {strides = array<i32>} : memref<48x256xf32, #tpu.memory_space<vmem>>, vector<16x63xf32>,
    %c0_43 = arith.constant 0 : index
    %c0_44 = arith.constant 0 : index
    %44 = vector.load %arg2[%c0_43, %c0_44] : memref<16x48xf32, #tpu.memory_space<vmem>>, vector<16x48xf32>
    %c0_45 = arith.constant 0 : index
    %c0_46 = arith.constant 0 : index
    %45 = vector.load %arg5[%c0_45, %c0_46] : memref<48x256xf32, #tpu.memory_space<vmem>>, vector<48x256xf32>
    %cst_47 = arith.constant dense<0.000000e+00> : vector<16x256xf32>
    %46 = tpu.matmul %44, %45, %cst_47 {dimension_numbers = #tpu.dot_dimension_numbers<[1], [0], [0], [1], [0, 0, 1, 1], [], []>} : vector<16x48xf32>, vector<48x256xf32>, vector<16x256xf32> -> vector<16x256xf32>
    %c0_48 = arith.constant 0 : index
    %c0_49 = arith.constant 0 : index
    %47 = vector.load %arg3[%c0_48, %c0_49] : memref<16x1xf32, #tpu.memory_space<vmem>>, vector<16x1xf32>
    %48 = vector.broadcast %47 : vector<16x1xf32> to vector<16x256xf32>
    %49 = arith.addf %46, %48 : vector<16x256xf32>
    %cst_50 = arith.constant 0.000000e+00 : f32
    %50 = vector.broadcast %cst_50 : f32 to vector<16x256xf32>
    %51 = arith.cmpf oge, %49, %50 : vector<16x256xf32>
    %cst_51 = arith.constant 2.000000e-01 : f32
    %52 = vector.broadcast %cst_51 : f32 to vector<16x256xf32>
    %53 = arith.mulf %52, %49 : vector<16x256xf32>
    %54 = arith.select %51, %49, %53 : vector<16x256xi1>, vector<16x256xf32>
    %55 = vector.extract_strided_slice %54 {offsets = [0, 0], sizes = [8, 64], strides = [1, 1]} : vector<16x256xf32> to vector<8x64xf32>
    %c0_52 = arith.constant 0 : index
    %c0_53 = arith.constant 0 : index
    %c0_54 = arith.constant 0 : index
    %56 = vector.load %arg4[%c0_52, %c0_53, %c0_54] : memref<4x8x128xf32, #tpu.memory_space<vmem>>, vector<1x8x64xf32>
    %57 = vector.shape_cast %56 : vector<1x8x64xf32> to vector<8x64xf32>
    %58 = vector.shape_cast %55 : vector<8x64xf32> to vector<1x8x64xf32>
    tpu.vector_store %arg4[%c0_52, %c0_53, %c0_54], %58 {strides = array<i32>} : memref<4x8x128xf32, #tpu.memory_space<vmem>>, vector<1x8x64xf32>,
    %59 = vector.extract_strided_slice %54 {offsets = [8, 0], sizes = [8, 64], strides = [1, 1]} : vector<16x256xf32> to vector<8x64xf32>
    %c0_55 = arith.constant 0 : index
    %c0_56 = arith.constant 0 : index
    %c64_57 = arith.constant 64 : index
    %60 = vector.load %arg4[%c0_55, %c0_56, %c64_57] : memref<4x8x128xf32, #tpu.memory_space<vmem>>, vector<1x8x64xf32>
    %61 = vector.shape_cast %60 : vector<1x8x64xf32> to vector<8x64xf32>
    %62 = vector.shape_cast %59 : vector<8x64xf32> to vector<1x8x64xf32>
    tpu.vector_store %arg4[%c0_55, %c0_56, %c64_57], %62 {strides = array<i32>} : memref<4x8x128xf32, #tpu.memory_space<vmem>>, vector<1x8x64xf32>,
    %63 = vector.extract_strided_slice %54 {offsets = [0, 64], sizes = [8, 64], strides = [1, 1]} : vector<16x256xf32> to vector<8x64xf32>
    %c1_58 = arith.constant 1 : index
    %c0_59 = arith.constant 0 : index
    %c0_60 = arith.constant 0 : index
    %64 = vector.load %arg4[%c1_58, %c0_59, %c0_60] : memref<4x8x128xf32, #tpu.memory_space<vmem>>, vector<1x8x64xf32>
    %65 = vector.shape_cast %64 : vector<1x8x64xf32> to vector<8x64xf32>
    %66 = vector.shape_cast %63 : vector<8x64xf32> to vector<1x8x64xf32>
    tpu.vector_store %arg4[%c1_58, %c0_59, %c0_60], %66 {strides = array<i32>} : memref<4x8x128xf32, #tpu.memory_space<vmem>>, vector<1x8x64xf32>,
    %67 = vector.extract_strided_slice %54 {offsets = [8, 64], sizes = [8, 64], strides = [1, 1]} : vector<16x256xf32> to vector<8x64xf32>
    %c1_61 = arith.constant 1 : index
    %c0_62 = arith.constant 0 : index
    %c64_63 = arith.constant 64 : index
    %68 = vector.load %arg4[%c1_61, %c0_62, %c64_63] : memref<4x8x128xf32, #tpu.memory_space<vmem>>, vector<1x8x64xf32>
    %69 = vector.shape_cast %68 : vector<1x8x64xf32> to vector<8x64xf32>
    %70 = vector.shape_cast %67 : vector<8x64xf32> to vector<1x8x64xf32>
    tpu.vector_store %arg4[%c1_61, %c0_62, %c64_63], %70 {strides = array<i32>} : memref<4x8x128xf32, #tpu.memory_space<vmem>>, vector<1x8x64xf32>,
    %71 = vector.extract_strided_slice %54 {offsets = [0, 128], sizes = [8, 64], strides = [1, 1]} : vector<16x256xf32> to vector<8x64xf32>
    %c2_64 = arith.constant 2 : index
    %c0_65 = arith.constant 0 : index
    %c0_66 = arith.constant 0 : index
    %72 = vector.load %arg4[%c2_64, %c0_65, %c0_66] : memref<4x8x128xf32, #tpu.memory_space<vmem>>, vector<1x8x64xf32>
    %73 = vector.shape_cast %72 : vector<1x8x64xf32> to vector<8x64xf32>
    %74 = vector.shape_cast %71 : vector<8x64xf32> to vector<1x8x64xf32>
    tpu.vector_store %arg4[%c2_64, %c0_65, %c0_66], %74 {strides = array<i32>} : memref<4x8x128xf32, #tpu.memory_space<vmem>>, vector<1x8x64xf32>,
    %75 = vector.extract_strided_slice %54 {offsets = [8, 128], sizes = [8, 64], strides = [1, 1]} : vector<16x256xf32> to vector<8x64xf32>
    %c2_67 = arith.constant 2 : index
    %c0_68 = arith.constant 0 : index
    %c64_69 = arith.constant 64 : index
    %76 = vector.load %arg4[%c2_67, %c0_68, %c64_69] : memref<4x8x128xf32, #tpu.memory_space<vmem>>, vector<1x8x64xf32>
    %77 = vector.shape_cast %76 : vector<1x8x64xf32> to vector<8x64xf32>
    %78 = vector.shape_cast %75 : vector<8x64xf32> to vector<1x8x64xf32>
    tpu.vector_store %arg4[%c2_67, %c0_68, %c64_69], %78 {strides = array<i32>} : memref<4x8x128xf32, #tpu.memory_space<vmem>>, vector<1x8x64xf32>,
    %79 = vector.extract_strided_slice %54 {offsets = [0, 192], sizes = [8, 64], strides = [1, 1]} : vector<16x256xf32> to vector<8x64xf32>
    %c3_70 = arith.constant 3 : index
    %c0_71 = arith.constant 0 : index
    %c0_72 = arith.constant 0 : index
    %80 = vector.load %arg4[%c3_70, %c0_71, %c0_72] : memref<4x8x128xf32, #tpu.memory_space<vmem>>, vector<1x8x64xf32>
    %81 = vector.shape_cast %80 : vector<1x8x64xf32> to vector<8x64xf32>
    %82 = vector.shape_cast %79 : vector<8x64xf32> to vector<1x8x64xf32>
    tpu.vector_store %arg4[%c3_70, %c0_71, %c0_72], %82 {strides = array<i32>} : memref<4x8x128xf32, #tpu.memory_space<vmem>>, vector<1x8x64xf32>,
    %83 = vector.extract_strided_slice %54 {offsets = [8, 192], sizes = [8, 64], strides = [1, 1]} : vector<16x256xf32> to vector<8x64xf32>
    %c3_73 = arith.constant 3 : index
    %c0_74 = arith.constant 0 : index
    %c64_75 = arith.constant 64 : index
    %84 = vector.load %arg4[%c3_73, %c0_74, %c64_75] : memref<4x8x128xf32, #tpu.memory_space<vmem>>, vector<1x8x64xf32>
    %85 = vector.shape_cast %84 : vector<1x8x64xf32> to vector<8x64xf32>
    %86 = vector.shape_cast %83 : vector<8x64xf32> to vector<1x8x64xf32>
    tpu.vector_store %arg4[%c3_73, %c0_74, %c64_75], %86 {strides = array<i32>} : memref<4x8x128xf32, #tpu.memory_space<vmem>>, vector<1x8x64xf32>,
    return
  }
  func.func @transform_0(%arg0: i32) -> (i32, i32, i32) {
    %c0_i32 = arith.constant 0 : i32
    %c0_i32_0 = arith.constant 0 : i32
    %c0_i32_1 = arith.constant 0 : i32
    return %arg0, %c0_i32, %c0_i32_0 : i32, i32, i32
  }
  func.func @transform_1(%arg0: i32) -> (i32, i32) {
    %c0_i32 = arith.constant 0 : i32
    %c0_i32_0 = arith.constant 0 : i32
    %c0_i32_1 = arith.constant 0 : i32
    return %c0_i32, %c0_i32_0 : i32, i32
  }
  func.func @transform_2(%arg0: i32) -> (i32, i32) {
    %c0_i32 = arith.constant 0 : i32
    %c0_i32_0 = arith.constant 0 : i32
    %c0_i32_1 = arith.constant 0 : i32
    return %c0_i32, %c0_i32_0 : i32, i32
  }
  func.func @transform_3(%arg0: i32) -> (i32, i32, i32) {
    %c0_i32 = arith.constant 0 : i32
    %c0_i32_0 = arith.constant 0 : i32
    %c0_i32_1 = arith.constant 0 : i32
    return %arg0, %c0_i32, %c0_i32_0 : i32, i32, i32
  }
}

</mosaic_0001>

<llo_original>
// kernel: tpu_custom_call.1
$region0: #{tpu_custom_call.1}
  #allocation0 [shape = 'u32[]', space=smem, size = 0x4, offset = 0x4, fixed_abs, tag = 'smem constant byte address 0x4 - core index']
  #allocation1 [shape = 'u32[144,128]{1,0:T(1,128)}', space=vmem, size = 0x12000, scoped, tag = 'internal scratch']
  %s0 = inlined_call_operand.hbm [shape: f32[8,64], index: 0, kind: input, shape index: {}]
  %s1 = inlined_call_operand.hbm [shape: f32[8,64], index: 1, kind: input, shape index: {}]
  %s2 = inlined_call_operand.hbm [shape: f32[8,128], index: 2, kind: output, shape index: {}]
  %s3 = sld [smem:[#allocation0]]
  $region26: #{tpu_custom_call.1} parent=0
    _
  %s5 = ssub.s32 1, %s3
  %s6 = scalar_select 0, %s5, %s3
  $region1: #{tpu_custom_call.1} parent=0
    #allocation2 [shape = 'u8[4096]{0}', space=vmem, size = 0x1000, scoped, tag = 'input window, operand 0, single buffered']
    #allocation3 [shape = 's32[1]{0}', space=sflag, size = 0x4, scoped, tag = 'scoped memory for tpu_custom_call.1']
    #allocation4 [shape = 's32[1]{0}', space=sflag, size = 0x4, scoped, tag = 'scoped memory for tpu_custom_call.1']
    #allocation5 [shape = 'u8[4096]{0}', space=vmem, size = 0x1000, scoped, tag = 'input window, operand 1, single buffered']
    #allocation6 [shape = 's32[1]{0}', space=sflag, size = 0x4, scoped, tag = 'scoped memory for tpu_custom_call.1']
    #allocation7 [shape = 'u8[4096]{0}', space=vmem, size = 0x1000, scoped, tag = 'output window, operand 0, single buffered']
    %7 = vsyncpa [#allocation3], 0
    %8 = vsyncpa [#allocation6], 0
    %9 = vsyncpa [#allocation4], 0
    // Predicated region
    $region2: #{tpu_custom_call.1} parent=1 // pred_check
      _
    $region3: #{tpu_custom_call.1} parent=1 // pred_check_branch
      %11 = sbr.rel (0) target = $region5
    $region4: #{tpu_custom_call.1} parent=1 // pred_region
      %s13 = ssub.s32 128, 128
      %14 = vsyncadd [#allocation3], %s13
      %s16 = sshll.u32 [#allocation2], 4
      %s17 = int_to_ptr.vmem [resolvable:$true] %s16
      %19 = dma.hbm_to_vmem [thread:$0]  %s0, 128, %s17, [#allocation3]
    $region5: #{tpu_custom_call.1} parent=1 // pred_fallthru
      _
    // Predicated region
    $region6: #{tpu_custom_call.1} parent=1 // pred_check
      _
    $region7: #{tpu_custom_call.1} parent=1 // pred_check_branch
      %21 = sbr.rel (0) target = $region9
    $region8: #{tpu_custom_call.1} parent=1 // pred_region
      %s23 = ssub.s32 128, 128
      %24 = vsyncadd [#allocation6], %s23
      %s26 = sshll.u32 [#allocation5], 4
      %s27 = int_to_ptr.vmem [resolvable:$true] %s26
      %29 = dma.hbm_to_vmem [thread:$0]  %s1, 128, %s27, [#allocation6]
    $region9: #{tpu_custom_call.1} parent=1 // pred_fallthru
      _
    // Predicated region
    $region10: #{tpu_custom_call.1} parent=1 // pred_check
      _
    $region11: #{tpu_custom_call.1} parent=1 // pred_check_branch
      %31 = sbr.rel (0) target = $region13
    $region12: #{tpu_custom_call.1} parent=1 // pred_region
      %32 = dma.done [#allocation3], 128
    $region13: #{tpu_custom_call.1} parent=1 // pred_fallthru
      _
    // Predicated region
    $region14: #{tpu_custom_call.1} parent=1 // pred_check
      _
    $region15: #{tpu_custom_call.1} parent=1 // pred_check_branch
      %34 = sbr.rel (0) target = $region17
    $region16: #{tpu_custom_call.1} parent=1 // pred_region
      %35 = dma.done [#allocation6], 128
    $region17: #{tpu_custom_call.1} parent=1 // pred_fallthru
      _
    %v36 = vld [vmem:[#allocation2] sm:$0xff]
    %v37 = vld [vmem:[#allocation5] sm:$0xff]
    %v38 = vlaneseq
    %v39 = vshrl.u32 %v38, 7
    %v40 = vsub.s32 0, %v39
    %v41 = vrot.slane %v36, %v40
    %43 = vbcast.lane.b32.xlu0 %v41, 256
    %v44 = vpop.permute.xlu0 %43
    %s46 = sor.u32 256, 8
    %47 = vbcast.lane.b32.xlu0 %v41, %s46
    %v48 = vpop.permute.xlu0 %47
    %s50 = sor.u32 256, 16
    %51 = vbcast.lane.b32.xlu0 %v41, %s50
    %v52 = vpop.permute.xlu0 %51
    %s54 = sor.u32 256, 24
    %55 = vbcast.lane.b32.xlu0 %v41, %s54
    %v56 = vpop.permute.xlu0 %55
    %s58 = sor.u32 256, 32
    %59 = vbcast.lane.b32.xlu0 %v41, %s58
    %v60 = vpop.permute.xlu0 %59
    %s62 = sor.u32 256, 40
    %63 = vbcast.lane.b32.xlu0 %v41, %s62
    %v64 = vpop.permute.xlu0 %63
    %s66 = sor.u32 256, 48
    %67 = vbcast.lane.b32.xlu0 %v41, %s66
    %v68 = vpop.permute.xlu0 %67
    %s70 = sor.u32 256, 56
    %71 = vbcast.lane.b32.xlu0 %v41, %s70
    %v72 = vpop.permute.xlu0 %71
    %v73 = vlaneseq
    %v74 = vshrl.u32 %v73, 7
    %v75 = vsub.s32 1, %v74
    %v76 = vrot.slane %v36, %v75
    %78 = vbcast.lane.b32.xlu0 %v76, 256
    %v79 = vpop.permute.xlu0 %78
    %s81 = sor.u32 256, 8
    %82 = vbcast.lane.b32.xlu0 %v76, %s81
    %v83 = vpop.permute.xlu0 %82
    %s85 = sor.u32 256, 16
    %86 = vbcast.lane.b32.xlu0 %v76, %s85
    %v87 = vpop.permute.xlu0 %86
    %s89 = sor.u32 256, 24
    %90 = vbcast.lane.b32.xlu0 %v76, %s89
    %v91 = vpop.permute.xlu0 %90
    %s93 = sor.u32 256, 32
    %94 = vbcast.lane.b32.xlu0 %v76, %s93
    %v95 = vpop.permute.xlu0 %94
    %s97 = sor.u32 256, 40
    %98 = vbcast.lane.b32.xlu0 %v76, %s97
    %v99 = vpop.permute.xlu0 %98
    %s101 = sor.u32 256, 48
    %102 = vbcast.lane.b32.xlu0 %v76, %s101
    %v103 = vpop.permute.xlu0 %102
    %s105 = sor.u32 256, 56
    %106 = vbcast.lane.b32.xlu0 %v76, %s105
    %v107 = vpop.permute.xlu0 %106
    %v108 = vlaneseq
    %v109 = vshrl.u32 %v108, 7
    %v110 = vsub.s32 2, %v109
    %v111 = vrot.slane %v36, %v110
    %113 = vbcast.lane.b32.xlu0 %v111, 256
    %v114 = vpop.permute.xlu0 %113
    %s116 = sor.u32 256, 8
    %117 = vbcast.lane.b32.xlu0 %v111, %s116
    %v118 = vpop.permute.xlu0 %117
    %s120 = sor.u32 256, 16
    %121 = vbcast.lane.b32.xlu0 %v111, %s120
    %v122 = vpop.permute.xlu0 %121
    %s124 = sor.u32 256, 24
    %125 = vbcast.lane.b32.xlu0 %v111, %s124
    %v126 = vpop.permute.xlu0 %125
    %s128 = sor.u32 256, 32
    %129 = vbcast.lane.b32.xlu0 %v111, %s128
    %v130 = vpop.permute.xlu0 %129
    %s132 = sor.u32 256, 40
    %133 = vbcast.lane.b32.xlu0 %v111, %s132
    %v134 = vpop.permute.xlu0 %133
    %s136 = sor.u32 256, 48
    %137 = vbcast.lane.b32.xlu0 %v111, %s136
    %v138 = vpop.permute.xlu0 %137
    %s140 = sor.u32 256, 56
    %141 = vbcast.lane.b32.xlu0 %v111, %s140
    %v142 = vpop.permute.xlu0 %141
    %v143 = vlaneseq
    %v144 = vshrl.u32 %v143, 7
    %v145 = vsub.s32 3, %v144
    %v146 = vrot.slane %v36, %v145
    %148 = vbcast.lane.b32.xlu0 %v146, 256
    %v149 = vpop.permute.xlu0 %148
    %s151 = sor.u32 256, 8
    %152 = vbcast.lane.b32.xlu0 %v146, %s151
    %v153 = vpop.permute.xlu0 %152
    %s155 = sor.u32 256, 16
    %156 = vbcast.lane.b32.xlu0 %v146, %s155
    %v157 = vpop.permute.xlu0 %156
    %s159 = sor.u32 256, 24
    %160 = vbcast.lane.b32.xlu0 %v146, %s159
    %v161 = vpop.permute.xlu0 %160
    %s163 = sor.u32 256, 32
    %164 = vbcast.lane.b32.xlu0 %v146, %s163
    %v165 = vpop.permute.xlu0 %164
    %s167 = sor.u32 256, 40
    %168 = vbcast.lane.b32.xlu0 %v146, %s167
    %v169 = vpop.permute.xlu0 %168
    %s171 = sor.u32 256, 48
    %172 = vbcast.lane.b32.xlu0 %v146, %s171
    %v173 = vpop.permute.xlu0 %172
    %s175 = sor.u32 256, 56
    %176 = vbcast.lane.b32.xlu0 %v146, %s175
    %v177 = vpop.permute.xlu0 %176
    %v178 = vlaneseq
    %v179 = vshrl.u32 %v178, 7
    %v180 = vsub.s32 4, %v179
    %v181 = vrot.slane %v36, %v180
    %183 = vbcast.lane.b32.xlu0 %v181, 256
    %v184 = vpop.permute.xlu0 %183
    %s186 = sor.u32 256, 8
    %187 = vbcast.lane.b32.xlu0 %v181, %s186
    %v188 = vpop.permute.xlu0 %187
    %s190 = sor.u32 256, 16
    %191 = vbcast.lane.b32.xlu0 %v181, %s190
    %v192 = vpop.permute.xlu0 %191
    %s194 = sor.u32 256, 24
    %195 = vbcast.lane.b32.xlu0 %v181, %s194
    %v196 = vpop.permute.xlu0 %195
    %s198 = sor.u32 256, 32
    %199 = vbcast.lane.b32.xlu0 %v181, %s198
    %v200 = vpop.permute.xlu0 %199
    %s202 = sor.u32 256, 40
    %203 = vbcast.lane.b32.xlu0 %v181, %s202
    %v204 = vpop.permute.xlu0 %203
    %s206 = sor.u32 256, 48
    %207 = vbcast.lane.b32.xlu0 %v181, %s206
    %v208 = vpop.permute.xlu0 %207
    %s210 = sor.u32 256, 56
    %211 = vbcast.lane.b32.xlu0 %v181, %s210
    %v212 = vpop.permute.xlu0 %211
    %v213 = vlaneseq
    %v214 = vshrl.u32 %v213, 7
    %v215 = vsub.s32 5, %v214
    %v216 = vrot.slane %v36, %v215
    %218 = vbcast.lane.b32.xlu0 %v216, 256
    %v219 = vpop.permute.xlu0 %218
    %s221 = sor.u32 256, 8
    %222 = vbcast.lane.b32.xlu0 %v216, %s221
    %v223 = vpop.permute.xlu0 %222
    %s225 = sor.u32 256, 16
    %226 = vbcast.lane.b32.xlu0 %v216, %s225
    %v227 = vpop.permute.xlu0 %226
    %s229 = sor.u32 256, 24
    %230 = vbcast.lane.b32.xlu0 %v216, %s229
    %v231 = vpop.permute.xlu0 %230
    %s233 = sor.u32 256, 32
    %234 = vbcast.lane.b32.xlu0 %v216, %s233
    %v235 = vpop.permute.xlu0 %234
    %s237 = sor.u32 256, 40
    %238 = vbcast.lane.b32.xlu0 %v216, %s237
    %v239 = vpop.permute.xlu0 %238
    %s241 = sor.u32 256, 48
    %242 = vbcast.lane.b32.xlu0 %v216, %s241
    %v243 = vpop.permute.xlu0 %242
    %s245 = sor.u32 256, 56
    %246 = vbcast.lane.b32.xlu0 %v216, %s245
    %v247 = vpop.permute.xlu0 %246
    %v248 = vlaneseq
    %v249 = vshrl.u32 %v248, 7
    %v250 = vsub.s32 6, %v249
    %v251 = vrot.slane %v36, %v250
    %253 = vbcast.lane.b32.xlu0 %v251, 256
    %v254 = vpop.permute.xlu0 %253
    %s256 = sor.u32 256, 8
    %257 = vbcast.lane.b32.xlu0 %v251, %s256
    %v258 = vpop.permute.xlu0 %257
    %s260 = sor.u32 256, 16
    %261 = vbcast.lane.b32.xlu0 %v251, %s260
    %v262 = vpop.permute.xlu0 %261
    %s264 = sor.u32 256, 24
    %265 = vbcast.lane.b32.xlu0 %v251, %s264
    %v266 = vpop.permute.xlu0 %265
    %s268 = sor.u32 256, 32
    %269 = vbcast.lane.b32.xlu0 %v251, %s268
    %v270 = vpop.permute.xlu0 %269
    %s272 = sor.u32 256, 40
    %273 = vbcast.lane.b32.xlu0 %v251, %s272
    %v274 = vpop.permute.xlu0 %273
    %s276 = sor.u32 256, 48
    %277 = vbcast.lane.b32.xlu0 %v251, %s276
    %v278 = vpop.permute.xlu0 %277
    %s280 = sor.u32 256, 56
    %281 = vbcast.lane.b32.xlu0 %v251, %s280
    %v282 = vpop.permute.xlu0 %281
    %v283 = vlaneseq
    %v284 = vshrl.u32 %v283, 7
    %v285 = vsub.s32 7, %v284
    %v286 = vrot.slane %v36, %v285
    %288 = vbcast.lane.b32.xlu0 %v286, 256
    %v289 = vpop.permute.xlu0 %288
    %s291 = sor.u32 256, 8
    %292 = vbcast.lane.b32.xlu0 %v286, %s291
    %v293 = vpop.permute.xlu0 %292
    %s295 = sor.u32 256, 16
    %296 = vbcast.lane.b32.xlu0 %v286, %s295
    %v297 = vpop.permute.xlu0 %296
    %s299 = sor.u32 256, 24
    %300 = vbcast.lane.b32.xlu0 %v286, %s299
    %v301 = vpop.permute.xlu0 %300
    %s303 = sor.u32 256, 32
    %304 = vbcast.lane.b32.xlu0 %v286, %s303
    %v305 = vpop.permute.xlu0 %304
    %s307 = sor.u32 256, 40
    %308 = vbcast.lane.b32.xlu0 %v286, %s307
    %v309 = vpop.permute.xlu0 %308
    %s311 = sor.u32 256, 48
    %312 = vbcast.lane.b32.xlu0 %v286, %s311
    %v313 = vpop.permute.xlu0 %312
    %s315 = sor.u32 256, 56
    %316 = vbcast.lane.b32.xlu0 %v286, %s315
    %v317 = vpop.permute.xlu0 %316
    %v318 = vlaneseq
    %v319 = vshrl.u32 %v318, 7
    %v320 = vsub.s32 0, %v319
    %v321 = vrot.slane %v37, %v320
    %323 = vbcast.lane.b32.xlu0 %v321, 256
    %v324 = vpop.permute.xlu0 %323
    %s326 = sor.u32 256, 8
    %327 = vbcast.lane.b32.xlu0 %v321, %s326
    %v328 = vpop.permute.xlu0 %327
    %s330 = sor.u32 256, 16
    %331 = vbcast.lane.b32.xlu0 %v321, %s330
    %v332 = vpop.permute.xlu0 %331
    %s334 = sor.u32 256, 24
    %335 = vbcast.lane.b32.xlu0 %v321, %s334
    %v336 = vpop.permute.xlu0 %335
    %s338 = sor.u32 256, 32
    %339 = vbcast.lane.b32.xlu0 %v321, %s338
    %v340 = vpop.permute.xlu0 %339
    %s342 = sor.u32 256, 40
    %343 = vbcast.lane.b32.xlu0 %v321, %s342
    %v344 = vpop.permute.xlu0 %343
    %s346 = sor.u32 256, 48
    %347 = vbcast.lane.b32.xlu0 %v321, %s346
    %v348 = vpop.permute.xlu0 %347
    %s350 = sor.u32 256, 56
    %351 = vbcast.lane.b32.xlu0 %v321, %s350
    %v352 = vpop.permute.xlu0 %351
    %v353 = vlaneseq
    %v354 = vshrl.u32 %v353, 7
    %v355 = vsub.s32 1, %v354
    %v356 = vrot.slane %v37, %v355
    %358 = vbcast.lane.b32.xlu0 %v356, 256
    %v359 = vpop.permute.xlu0 %358
    %s361 = sor.u32 256, 8
    %362 = vbcast.lane.b32.xlu0 %v356, %s361
    %v363 = vpop.permute.xlu0 %362
    %s365 = sor.u32 256, 16
    %366 = vbcast.lane.b32.xlu0 %v356, %s365
    %v367 = vpop.permute.xlu0 %366
    %s369 = sor.u32 256, 24
    %370 = vbcast.lane.b32.xlu0 %v356, %s369
    %v371 = vpop.permute.xlu0 %370
    %s373 = sor.u32 256, 32
    %374 = vbcast.lane.b32.xlu0 %v356, %s373
    %v375 = vpop.permute.xlu0 %374
    %s377 = sor.u32 256, 40
    %378 = vbcast.lane.b32.xlu0 %v356, %s377
    %v379 = vpop.permute.xlu0 %378
    %s381 = sor.u32 256, 48
    %382 = vbcast.lane.b32.xlu0 %v356, %s381
    %v383 = vpop.permute.xlu0 %382
    %s385 = sor.u32 256, 56
    %386 = vbcast.lane.b32.xlu0 %v356, %s385
    %v387 = vpop.permute.xlu0 %386
    %v388 = vlaneseq
    %v389 = vshrl.u32 %v388, 7
    %v390 = vsub.s32 2, %v389
    %v391 = vrot.slane %v37, %v390
    %393 = vbcast.lane.b32.xlu0 %v391, 256
    %v394 = vpop.permute.xlu0 %393
    %s396 = sor.u32 256, 8
    %397 = vbcast.lane.b32.xlu0 %v391, %s396
    %v398 = vpop.permute.xlu0 %397
    %s400 = sor.u32 256, 16
    %401 = vbcast.lane.b32.xlu0 %v391, %s400
    %v402 = vpop.permute.xlu0 %401
    %s404 = sor.u32 256, 24
    %405 = vbcast.lane.b32.xlu0 %v391, %s404
    %v406 = vpop.permute.xlu0 %405
    %s408 = sor.u32 256, 32
    %409 = vbcast.lane.b32.xlu0 %v391, %s408
    %v410 = vpop.permute.xlu0 %409
    %s412 = sor.u32 256, 40
    %413 = vbcast.lane.b32.xlu0 %v391, %s412
    %v414 = vpop.permute.xlu0 %413
    %s416 = sor.u32 256, 48
    %417 = vbcast.lane.b32.xlu0 %v391, %s416
    %v418 = vpop.permute.xlu0 %417
    %s420 = sor.u32 256, 56
    %421 = vbcast.lane.b32.xlu0 %v391, %s420
    %v422 = vpop.permute.xlu0 %421
    %v423 = vlaneseq
    %v424 = vshrl.u32 %v423, 7
    %v425 = vsub.s32 3, %v424
    %v426 = vrot.slane %v37, %v425
    %428 = vbcast.lane.b32.xlu0 %v426, 256
    %v429 = vpop.permute.xlu0 %428
    %s431 = sor.u32 256, 8
    %432 = vbcast.lane.b32.xlu0 %v426, %s431
    %v433 = vpop.permute.xlu0 %432
    %s435 = sor.u32 256, 16
    %436 = vbcast.lane.b32.xlu0 %v426, %s435
    %v437 = vpop.permute.xlu0 %436
    %s439 = sor.u32 256, 24
    %440 = vbcast.lane.b32.xlu0 %v426, %s439
    %v441 = vpop.permute.xlu0 %440
    %s443 = sor.u32 256, 32
    %444 = vbcast.lane.b32.xlu0 %v426, %s443
    %v445 = vpop.permute.xlu0 %444
    %s447 = sor.u32 256, 40
    %448 = vbcast.lane.b32.xlu0 %v426, %s447
    %v449 = vpop.permute.xlu0 %448
    %s451 = sor.u32 256, 48
    %452 = vbcast.lane.b32.xlu0 %v426, %s451
    %v453 = vpop.permute.xlu0 %452
    %s455 = sor.u32 256, 56
    %456 = vbcast.lane.b32.xlu0 %v426, %s455
    %v457 = vpop.permute.xlu0 %456
    %v458 = vlaneseq
    %v459 = vshrl.u32 %v458, 7
    %v460 = vsub.s32 4, %v459
    %v461 = vrot.slane %v37, %v460
    %463 = vbcast.lane.b32.xlu0 %v461, 256
    %v464 = vpop.permute.xlu0 %463
    %s466 = sor.u32 256, 8
    %467 = vbcast.lane.b32.xlu0 %v461, %s466
    %v468 = vpop.permute.xlu0 %467
    %s470 = sor.u32 256, 16
    %471 = vbcast.lane.b32.xlu0 %v461, %s470
    %v472 = vpop.permute.xlu0 %471
    %s474 = sor.u32 256, 24
    %475 = vbcast.lane.b32.xlu0 %v461, %s474
    %v476 = vpop.permute.xlu0 %475
    %s478 = sor.u32 256, 32
    %479 = vbcast.lane.b32.xlu0 %v461, %s478
    %v480 = vpop.permute.xlu0 %479
    %s482 = sor.u32 256, 40
    %483 = vbcast.lane.b32.xlu0 %v461, %s482
    %v484 = vpop.permute.xlu0 %483
    %s486 = sor.u32 256, 48
    %487 = vbcast.lane.b32.xlu0 %v461, %s486
    %v488 = vpop.permute.xlu0 %487
    %s490 = sor.u32 256, 56
    %491 = vbcast.lane.b32.xlu0 %v461, %s490
    %v492 = vpop.permute.xlu0 %491
    %v493 = vlaneseq
    %v494 = vshrl.u32 %v493, 7
    %v495 = vsub.s32 5, %v494
    %v496 = vrot.slane %v37, %v495
    %498 = vbcast.lane.b32.xlu0 %v496, 256
    %v499 = vpop.permute.xlu0 %498
    %s501 = sor.u32 256, 8
    %502 = vbcast.lane.b32.xlu0 %v496, %s501
    %v503 = vpop.permute.xlu0 %502
    %s505 = sor.u32 256, 16
    %506 = vbcast.lane.b32.xlu0 %v496, %s505
    %v507 = vpop.permute.xlu0 %506
    %s509 = sor.u32 256, 24
    %510 = vbcast.lane.b32.xlu0 %v496, %s509
    %v511 = vpop.permute.xlu0 %510
    %s513 = sor.u32 256, 32
    %514 = vbcast.lane.b32.xlu0 %v496, %s513
    %v515 = vpop.permute.xlu0 %514
    %s517 = sor.u32 256, 40
    %518 = vbcast.lane.b32.xlu0 %v496, %s517
    %v519 = vpop.permute.xlu0 %518
    %s521 = sor.u32 256, 48
    %522 = vbcast.lane.b32.xlu0 %v496, %s521
    %v523 = vpop.permute.xlu0 %522
    %s525 = sor.u32 256, 56
    %526 = vbcast.lane.b32.xlu0 %v496, %s525
    %v527 = vpop.permute.xlu0 %526
    %v528 = vlaneseq
    %v529 = vshrl.u32 %v528, 7
    %v530 = vsub.s32 6, %v529
    %v531 = vrot.slane %v37, %v530
    %533 = vbcast.lane.b32.xlu0 %v531, 256
    %v534 = vpop.permute.xlu0 %533
    %s536 = sor.u32 256, 8
    %537 = vbcast.lane.b32.xlu0 %v531, %s536
    %v538 = vpop.permute.xlu0 %537
    %s540 = sor.u32 256, 16
    %541 = vbcast.lane.b32.xlu0 %v531, %s540
    %v542 = vpop.permute.xlu0 %541
    %s544 = sor.u32 256, 24
    %545 = vbcast.lane.b32.xlu0 %v531, %s544
    %v546 = vpop.permute.xlu0 %545
    %s548 = sor.u32 256, 32
    %549 = vbcast.lane.b32.xlu0 %v531, %s548
    %v550 = vpop.permute.xlu0 %549
    %s552 = sor.u32 256, 40
    %553 = vbcast.lane.b32.xlu0 %v531, %s552
    %v554 = vpop.permute.xlu0 %553
    %s556 = sor.u32 256, 48
    %557 = vbcast.lane.b32.xlu0 %v531, %s556
    %v558 = vpop.permute.xlu0 %557
    %s560 = sor.u32 256, 56
    %561 = vbcast.lane.b32.xlu0 %v531, %s560
    %v562 = vpop.permute.xlu0 %561
    %v563 = vlaneseq
    %v564 = vshrl.u32 %v563, 7
    %v565 = vsub.s32 7, %v564
    %v566 = vrot.slane %v37, %v565
    %568 = vbcast.lane.b32.xlu0 %v566, 256
    %v569 = vpop.permute.xlu0 %568
    %s571 = sor.u32 256, 8
    %572 = vbcast.lane.b32.xlu0 %v566, %s571
    %v573 = vpop.permute.xlu0 %572
    %s575 = sor.u32 256, 16
    %576 = vbcast.lane.b32.xlu0 %v566, %s575
    %v577 = vpop.permute.xlu0 %576
    %s579 = sor.u32 256, 24
    %580 = vbcast.lane.b32.xlu0 %v566, %s579
    %v581 = vpop.permute.xlu0 %580
    %s583 = sor.u32 256, 32
    %584 = vbcast.lane.b32.xlu0 %v566, %s583
    %v585 = vpop.permute.xlu0 %584
    %s587 = sor.u32 256, 40
    %588 = vbcast.lane.b32.xlu0 %v566, %s587
    %v589 = vpop.permute.xlu0 %588
    %s591 = sor.u32 256, 48
    %592 = vbcast.lane.b32.xlu0 %v566, %s591
    %v593 = vpop.permute.xlu0 %592
    %s595 = sor.u32 256, 56
    %596 = vbcast.lane.b32.xlu0 %v566, %s595
    %v597 = vpop.permute.xlu0 %596
    %vm598 = vcmask 7168
    %v599 = vsel %vm598, %v44, %v324
    %v600 = vsel %vm598, %v48, %v328
    %v601 = vsel %vm598, %v52, %v332
    %v602 = vsel %vm598, %v56, %v336
    %v603 = vsel %vm598, %v60, %v340
    %v604 = vsel %vm598, %v64, %v344
    %v605 = vsel %vm598, %v68, %v348
    %v606 = vsel %vm598, %v72, %v352
    %v607 = vsel %vm598, %v79, %v359
    %v608 = vsel %vm598, %v83, %v363
    %v609 = vsel %vm598, %v87, %v367
    %v610 = vsel %vm598, %v91, %v371
    %v611 = vsel %vm598, %v95, %v375
    %v612 = vsel %vm598, %v99, %v379
    %v613 = vsel %vm598, %v103, %v383
    %v614 = vsel %vm598, %v107, %v387
    %v615 = vsel %vm598, %v114, %v394
    %v616 = vsel %vm598, %v118, %v398
    %v617 = vsel %vm598, %v122, %v402
    %v618 = vsel %vm598, %v126, %v406
    %v619 = vsel %vm598, %v130, %v410
    %v620 = vsel %vm598, %v134, %v414
    %v621 = vsel %vm598, %v138, %v418
    %v622 = vsel %vm598, %v142, %v422
    %v623 = vsel %vm598, %v149, %v429
    %v624 = vsel %vm598, %v153, %v433
    %v625 = vsel %vm598, %v157, %v437
    %v626 = vsel %vm598, %v161, %v441
    %v627 = vsel %vm598, %v165, %v445
    %v628 = vsel %vm598, %v169, %v449
    %v629 = vsel %vm598, %v173, %v453
    %v630 = vsel %vm598, %v177, %v457
    %v631 = vsel %vm598, %v184, %v464
    %v632 = vsel %vm598, %v188, %v468
    %v633 = vsel %vm598, %v192, %v472
    %v634 = vsel %vm598, %v196, %v476
    %v635 = vsel %vm598, %v200, %v480
    %v636 = vsel %vm598, %v204, %v484
    %v637 = vsel %vm598, %v208, %v488
    %v638 = vsel %vm598, %v212, %v492
    %v639 = vsel %vm598, %v219, %v499
    %v640 = vsel %vm598, %v223, %v503
    %v641 = vsel %vm598, %v227, %v507
    %v642 = vsel %vm598, %v231, %v511
    %v643 = vsel %vm598, %v235, %v515
    %v644 = vsel %vm598, %v239, %v519
    %v645 = vsel %vm598, %v243, %v523
    %v646 = vsel %vm598, %v247, %v527
    %v647 = vsel %vm598, %v254, %v534
    %v648 = vsel %vm598, %v258, %v538
    %v649 = vsel %vm598, %v262, %v542
    %v650 = vsel %vm598, %v266, %v546
    %v651 = vsel %vm598, %v270, %v550
    %v652 = vsel %vm598, %v274, %v554
    %v653 = vsel %vm598, %v278, %v558
    %v654 = vsel %vm598, %v282, %v562
    %v655 = vsel %vm598, %v289, %v569
    %v656 = vsel %vm598, %v293, %v573
    %v657 = vsel %vm598, %v297, %v577
    %v658 = vsel %vm598, %v301, %v581
    %v659 = vsel %vm598, %v305, %v585
    %v660 = vsel %vm598, %v309, %v589
    %v661 = vsel %vm598, %v313, %v593
    %v662 = vsel %vm598, %v317, %v597
    %v663 = vcombine.low %v599, %v615
    %v664 = vcombine.high %v599, %v615
    %v666 = vunpack.c.l.s4 1983009808
    %v667 = vunpack.c.0.s8 %v666
    %v668 = vlaneseq
    %v669 = vshrl.u32 %v668, 7
    %v670 = vsub.s32 %v667, %v669
    %v671 = vrot.slane %v663, %v670
    %v673 = vunpack.c.l.s4 1983009808
    %v674 = vunpack.c.0.s8 %v673
    %v675 = vlaneseq
    %v676 = vshrl.u32 %v675, 7
    %v677 = vsub.s32 %v674, %v676
    %v678 = vrot.slane %v664, %v677
    %v679 = vcombine.low %v607, %v623
    %v680 = vcombine.high %v607, %v623
    %v682 = vunpack.c.l.s4 1983009808
    %v683 = vunpack.c.0.s8 %v682
    %v684 = vlaneseq
    %v685 = vshrl.u32 %v684, 7
    %v686 = vsub.s32 %v683, %v685
    %v687 = vrot.slane %v679, %v686
    %v689 = vunpack.c.l.s4 1983009808
    %v690 = vunpack.c.0.s8 %v689
    %v691 = vlaneseq
    %v692 = vshrl.u32 %v691, 7
    %v693 = vsub.s32 %v690, %v692
    %v694 = vrot.slane %v680, %v693
    %v695 = vcombine.low %v631, %v647
    %v696 = vcombine.high %v631, %v647
    %v698 = vunpack.c.l.s4 1983009808
    %v699 = vunpack.c.0.s8 %v698
    %v700 = vlaneseq
    %v701 = vshrl.u32 %v700, 7
    %v702 = vsub.s32 %v699, %v701
    %v703 = vrot.slane %v695, %v702
    %v705 = vunpack.c.l.s4 1983009808
    %v706 = vunpack.c.0.s8 %v705
    %v707 = vlaneseq
    %v708 = vshrl.u32 %v707, 7
    %v709 = vsub.s32 %v706, %v708
    %v710 = vrot.slane %v696, %v709
    %v711 = vcombine.low %v639, %v655
    %v712 = vcombine.high %v639, %v655
    %v714 = vunpack.c.l.s4 1983009808
    %v715 = vunpack.c.0.s8 %v714
    %v716 = vlaneseq
    %v717 = vshrl.u32 %v716, 7
    %v718 = vsub.s32 %v715, %v717
    %v719 = vrot.slane %v711, %v718
    %v721 = vunpack.c.l.s4 1983009808
    %v722 = vunpack.c.0.s8 %v721
    %v723 = vlaneseq
    %v724 = vshrl.u32 %v723, 7
    %v725 = vsub.s32 %v722, %v724
    %v726 = vrot.slane %v712, %v725
    %v727 = vcombine.low %v671, %v687
    %v728 = vcombine.high %v671, %v687
    %v730 = vunpack.c.l.s4 1934713408
    %v731 = vunpack.c.0.s8 %v730
    %v732 = vlaneseq
    %v733 = vshrl.u32 %v732, 7
    %v734 = vsub.s32 %v731, %v733
    %v735 = vrot.slane %v727, %v734
    %v737 = vunpack.c.l.s4 1934713408
    %v738 = vunpack.c.0.s8 %v737
    %v739 = vlaneseq
    %v740 = vshrl.u32 %v739, 7
    %v741 = vsub.s32 %v738, %v740
    %v742 = vrot.slane %v728, %v741
    %v743 = vcombine.low %v678, %v694
    %v744 = vcombine.high %v678, %v694
    %v746 = vunpack.c.l.s4 1934713408
    %v747 = vunpack.c.0.s8 %v746
    %v748 = vlaneseq
    %v749 = vshrl.u32 %v748, 7
    %v750 = vsub.s32 %v747, %v749
    %v751 = vrot.slane %v743, %v750
    %v753 = vunpack.c.l.s4 1934713408
    %v754 = vunpack.c.0.s8 %v753
    %v755 = vlaneseq
    %v756 = vshrl.u32 %v755, 7
    %v757 = vsub.s32 %v754, %v756
    %v758 = vrot.slane %v744, %v757
    %v759 = vcombine.low %v703, %v719
    %v760 = vcombine.high %v703, %v719
    %v762 = vunpack.c.l.s4 1934713408
    %v763 = vunpack.c.0.s8 %v762
    %v764 = vlaneseq
    %v765 = vshrl.u32 %v764, 7
    %v766 = vsub.s32 %v763, %v765
    %v767 = vrot.slane %v759, %v766
    %v769 = vunpack.c.l.s4 1934713408
    %v770 = vunpack.c.0.s8 %v769
    %v771 = vlaneseq
    %v772 = vshrl.u32 %v771, 7
    %v773 = vsub.s32 %v770, %v772
    %v774 = vrot.slane %v760, %v773
    %v775 = vcombine.low %v710, %v726
    %v776 = vcombine.high %v710, %v726
    %v778 = vunpack.c.l.s4 1934713408
    %v779 = vunpack.c.0.s8 %v778
    %v780 = vlaneseq
    %v781 = vshrl.u32 %v780, 7
    %v782 = vsub.s32 %v779, %v781
    %v783 = vrot.slane %v775, %v782
    %v785 = vunpack.c.l.s4 1934713408
    %v786 = vunpack.c.0.s8 %v785
    %v787 = vlaneseq
    %v788 = vshrl.u32 %v787, 7
    %v789 = vsub.s32 %v786, %v788
    %v790 = vrot.slane %v776, %v789
    %v791 = vcombine.low %v735, %v767
    %v792 = vcombine.high %v735, %v767
    %v793 = vcombine.low %v742, %v774
    %v794 = vcombine.high %v742, %v774
    %v795 = vcombine.low %v751, %v783
    %v796 = vcombine.high %v751, %v783
    %v797 = vcombine.low %v758, %v790
    %v798 = vcombine.high %v758, %v790
    %v799 = vcombine.low %v600, %v616
    %v800 = vcombine.high %v600, %v616
    %v802 = vunpack.c.l.s4 1983009808
    %v803 = vunpack.c.0.s8 %v802
    %v804 = vlaneseq
    %v805 = vshrl.u32 %v804, 7
    %v806 = vsub.s32 %v803, %v805
    %v807 = vrot.slane %v799, %v806
    %v809 = vunpack.c.l.s4 1983009808
    %v810 = vunpack.c.0.s8 %v809
    %v811 = vlaneseq
    %v812 = vshrl.u32 %v811, 7
    %v813 = vsub.s32 %v810, %v812
    %v814 = vrot.slane %v800, %v813
    %v815 = vcombine.low %v608, %v624
    %v816 = vcombine.high %v608, %v624
    %v818 = vunpack.c.l.s4 1983009808
    %v819 = vunpack.c.0.s8 %v818
    %v820 = vlaneseq
    %v821 = vshrl.u32 %v820, 7
    %v822 = vsub.s32 %v819, %v821
    %v823 = vrot.slane %v815, %v822
    %v825 = vunpack.c.l.s4 1983009808
    %v826 = vunpack.c.0.s8 %v825
    %v827 = vlaneseq
    %v828 = vshrl.u32 %v827, 7
    %v829 = vsub.s32 %v826, %v828
    %v830 = vrot.slane %v816, %v829
    %v831 = vcombine.low %v632, %v648
    %v832 = vcombine.high %v632, %v648
    %v834 = vunpack.c.l.s4 1983009808
    %v835 = vunpack.c.0.s8 %v834
    %v836 = vlaneseq
    %v837 = vshrl.u32 %v836, 7
    %v838 = vsub.s32 %v835, %v837
    %v839 = vrot.slane %v831, %v838
    %v841 = vunpack.c.l.s4 1983009808
    %v842 = vunpack.c.0.s8 %v841
    %v843 = vlaneseq
    %v844 = vshrl.u32 %v843, 7
    %v845 = vsub.s32 %v842, %v844
    %v846 = vrot.slane %v832, %v845
    %v847 = vcombine.low %v640, %v656
    %v848 = vcombine.high %v640, %v656
    %v850 = vunpack.c.l.s4 1983009808
    %v851 = vunpack.c.0.s8 %v850
    %v852 = vlaneseq
    %v853 = vshrl.u32 %v852, 7
    %v854 = vsub.s32 %v851, %v853
    %v855 = vrot.slane %v847, %v854
    %v857 = vunpack.c.l.s4 1983009808
    %v858 = vunpack.c.0.s8 %v857
    %v859 = vlaneseq
    %v860 = vshrl.u32 %v859, 7
    %v861 = vsub.s32 %v858, %v860
    %v862 = vrot.slane %v848, %v861
    %v863 = vcombine.low %v807, %v823
    %v864 = vcombine.high %v807, %v823
    %v866 = vunpack.c.l.s4 1934713408
    %v867 = vunpack.c.0.s8 %v866
    %v868 = vlaneseq
    %v869 = vshrl.u32 %v868, 7
    %v870 = vsub.s32 %v867, %v869
    %v871 = vrot.slane %v863, %v870
    %v873 = vunpack.c.l.s4 1934713408
    %v874 = vunpack.c.0.s8 %v873
    %v875 = vlaneseq
    %v876 = vshrl.u32 %v875, 7
    %v877 = vsub.s32 %v874, %v876
    %v878 = vrot.slane %v864, %v877
    %v879 = vcombine.low %v814, %v830
    %v880 = vcombine.high %v814, %v830
    %v882 = vunpack.c.l.s4 1934713408
    %v883 = vunpack.c.0.s8 %v882
    %v884 = vlaneseq
    %v885 = vshrl.u32 %v884, 7
    %v886 = vsub.s32 %v883, %v885
    %v887 = vrot.slane %v879, %v886
    %v889 = vunpack.c.l.s4 1934713408
    %v890 = vunpack.c.0.s8 %v889
    %v891 = vlaneseq
    %v892 = vshrl.u32 %v891, 7
    %v893 = vsub.s32 %v890, %v892
    %v894 = vrot.slane %v880, %v893
    %v895 = vcombine.low %v839, %v855
    %v896 = vcombine.high %v839, %v855
    %v898 = vunpack.c.l.s4 1934713408
    %v899 = vunpack.c.0.s8 %v898
    %v900 = vlaneseq
    %v901 = vshrl.u32 %v900, 7
    %v902 = vsub.s32 %v899, %v901
    %v903 = vrot.slane %v895, %v902
    %v905 = vunpack.c.l.s4 1934713408
    %v906 = vunpack.c.0.s8 %v905
    %v907 = vlaneseq
    %v908 = vshrl.u32 %v907, 7
    %v909 = vsub.s32 %v906, %v908
    %v910 = vrot.slane %v896, %v909
    %v911 = vcombine.low %v846, %v862
    %v912 = vcombine.high %v846, %v862
    %v914 = vunpack.c.l.s4 1934713408
    %v915 = vunpack.c.0.s8 %v914
    %v916 = vlaneseq
    %v917 = vshrl.u32 %v916, 7
    %v918 = vsub.s32 %v915, %v917
    %v919 = vrot.slane %v911, %v918
    %v921 = vunpack.c.l.s4 1934713408
    %v922 = vunpack.c.0.s8 %v921
    %v923 = vlaneseq
    %v924 = vshrl.u32 %v923, 7
    %v925 = vsub.s32 %v922, %v924
    %v926 = vrot.slane %v912, %v925
    %v927 = vcombine.low %v871, %v903
    %v928 = vcombine.high %v871, %v903
    %v929 = vcombine.low %v878, %v910
    %v930 = vcombine.high %v878, %v910
    %v931 = vcombine.low %v887, %v919
    %v932 = vcombine.high %v887, %v919
    %v933 = vcombine.low %v894, %v926
    %v934 = vcombine.high %v894, %v926
    %v935 = vcombine.low %v601, %v617
    %v936 = vcombine.high %v601, %v617
    %v938 = vunpack.c.l.s4 1983009808
    %v939 = vunpack.c.0.s8 %v938
    %v940 = vlaneseq
    %v941 = vshrl.u32 %v940, 7
    %v942 = vsub.s32 %v939, %v941
    %v943 = vrot.slane %v935, %v942
    %v945 = vunpack.c.l.s4 1983009808
    %v946 = vunpack.c.0.s8 %v945
    %v947 = vlaneseq
    %v948 = vshrl.u32 %v947, 7
    %v949 = vsub.s32 %v946, %v948
    %v950 = vrot.slane %v936, %v949
    %v951 = vcombine.low %v609, %v625
    %v952 = vcombine.high %v609, %v625
    %v954 = vunpack.c.l.s4 1983009808
    %v955 = vunpack.c.0.s8 %v954
    %v956 = vlaneseq
    %v957 = vshrl.u32 %v956, 7
    %v958 = vsub.s32 %v955, %v957
    %v959 = vrot.slane %v951, %v958
    %v961 = vunpack.c.l.s4 1983009808
    %v962 = vunpack.c.0.s8 %v961
    %v963 = vlaneseq
    %v964 = vshrl.u32 %v963, 7
    %v965 = vsub.s32 %v962, %v964
    %v966 = vrot.slane %v952, %v965
    %v967 = vcombine.low %v633, %v649
    %v968 = vcombine.high %v633, %v649
    %v970 = vunpack.c.l.s4 1983009808
    %v971 = vunpack.c.0.s8 %v970
    %v972 = vlaneseq
    %v973 = vshrl.u32 %v972, 7
    %v974 = vsub.s32 %v971, %v973
    %v975 = vrot.slane %v967, %v974
    %v977 = vunpack.c.l.s4 1983009808
    %v978 = vunpack.c.0.s8 %v977
    %v979 = vlaneseq
    %v980 = vshrl.u32 %v979, 7
    %v981 = vsub.s32 %v978, %v980
    %v982 = vrot.slane %v968, %v981
    %v983 = vcombine.low %v641, %v657
    %v984 = vcombine.high %v641, %v657
    %v986 = vunpack.c.l.s4 1983009808
    %v987 = vunpack.c.0.s8 %v986
    %v988 = vlaneseq
    %v989 = vshrl.u32 %v988, 7
    %v990 = vsub.s32 %v987, %v989
    %v991 = vrot.slane %v983, %v990
    %v993 = vunpack.c.l.s4 1983009808
    %v994 = vunpack.c.0.s8 %v993
    %v995 = vlaneseq
    %v996 = vshrl.u32 %v995, 7
    %v997 = vsub.s32 %v994, %v996
    %v998 = vrot.slane %v984, %v997
    %v999 = vcombine.low %v943, %v959
    %v1000 = vcombine.high %v943, %v959
    %v1002 = vunpack.c.l.s4 1934713408
    %v1003 = vunpack.c.0.s8 %v1002
    %v1004 = vlaneseq
    %v1005 = vshrl.u32 %v1004, 7
    %v1006 = vsub.s32 %v1003, %v1005
    %v1007 = vrot.slane %v999, %v1006
    %v1009 = vunpack.c.l.s4 1934713408
    %v1010 = vunpack.c.0.s8 %v1009
    %v1011 = vlaneseq
    %v1012 = vshrl.u32 %v1011, 7
    %v1013 = vsub.s32 %v1010, %v1012
    %v1014 = vrot.slane %v1000, %v1013
    %v1015 = vcombine.low %v950, %v966
    %v1016 = vcombine.high %v950, %v966
    %v1018 = vunpack.c.l.s4 1934713408
    %v1019 = vunpack.c.0.s8 %v1018
    %v1020 = vlaneseq
    %v1021 = vshrl.u32 %v1020, 7
    %v1022 = vsub.s32 %v1019, %v1021
    %v1023 = vrot.slane %v1015, %v1022
    %v1025 = vunpack.c.l.s4 1934713408
    %v1026 = vunpack.c.0.s8 %v1025
    %v1027 = vlaneseq
    %v1028 = vshrl.u32 %v1027, 7
    %v1029 = vsub.s32 %v1026, %v1028
    %v1030 = vrot.slane %v1016, %v1029
    %v1031 = vcombine.low %v975, %v991
    %v1032 = vcombine.high %v975, %v991
    %v1034 = vunpack.c.l.s4 1934713408
    %v1035 = vunpack.c.0.s8 %v1034
    %v1036 = vlaneseq
    %v1037 = vshrl.u32 %v1036, 7
    %v1038 = vsub.s32 %v1035, %v1037
    %v1039 = vrot.slane %v1031, %v1038
    %v1041 = vunpack.c.l.s4 1934713408
    %v1042 = vunpack.c.0.s8 %v1041
    %v1043 = vlaneseq
    %v1044 = vshrl.u32 %v1043, 7
    %v1045 = vsub.s32 %v1042, %v1044
    %v1046 = vrot.slane %v1032, %v1045
    %v1047 = vcombine.low %v982, %v998
    %v1048 = vcombine.high %v982, %v998
    %v1050 = vunpack.c.l.s4 1934713408
    %v1051 = vunpack.c.0.s8 %v1050
    %v1052 = vlaneseq
    %v1053 = vshrl.u32 %v1052, 7
    %v1054 = vsub.s32 %v1051, %v1053
    %v1055 = vrot.slane %v1047, %v1054
    %v1057 = vunpack.c.l.s4 1934713408
    %v1058 = vunpack.c.0.s8 %v1057
    %v1059 = vlaneseq
    %v1060 = vshrl.u32 %v1059, 7
    %v1061 = vsub.s32 %v1058, %v1060
    %v1062 = vrot.slane %v1048, %v1061
    %v1063 = vcombine.low %v1007, %v1039
    %v1064 = vcombine.high %v1007, %v1039
    %v1065 = vcombine.low %v1014, %v1046
    %v1066 = vcombine.high %v1014, %v1046
    %v1067 = vcombine.low %v1023, %v1055
    %v1068 = vcombine.high %v1023, %v1055
    %v1069 = vcombine.low %v1030, %v1062
    %v1070 = vcombine.high %v1030, %v1062
    %v1071 = vcombine.low %v602, %v618
    %v1072 = vcombine.high %v602, %v618
    %v1074 = vunpack.c.l.s4 1983009808
    %v1075 = vunpack.c.0.s8 %v1074
    %v1076 = vlaneseq
    %v1077 = vshrl.u32 %v1076, 7
    %v1078 = vsub.s32 %v1075, %v1077
    %v1079 = vrot.slane %v1071, %v1078
    %v1081 = vunpack.c.l.s4 1983009808
    %v1082 = vunpack.c.0.s8 %v1081
    %v1083 = vlaneseq
    %v1084 = vshrl.u32 %v1083, 7
    %v1085 = vsub.s32 %v1082, %v1084
    %v1086 = vrot.slane %v1072, %v1085
    %v1087 = vcombine.low %v610, %v626
    %v1088 = vcombine.high %v610, %v626
    %v1090 = vunpack.c.l.s4 1983009808
    %v1091 = vunpack.c.0.s8 %v1090
    %v1092 = vlaneseq
    %v1093 = vshrl.u32 %v1092, 7
    %v1094 = vsub.s32 %v1091, %v1093
    %v1095 = vrot.slane %v1087, %v1094
    %v1097 = vunpack.c.l.s4 1983009808
    %v1098 = vunpack.c.0.s8 %v1097
    %v1099 = vlaneseq
    %v1100 = vshrl.u32 %v1099, 7
    %v1101 = vsub.s32 %v1098, %v1100
    %v1102 = vrot.slane %v1088, %v1101
    %v1103 = vcombine.low %v634, %v650
    %v1104 = vcombine.high %v634, %v650
    %v1106 = vunpack.c.l.s4 1983009808
    %v1107 = vunpack.c.0.s8 %v1106
    %v1108 = vlaneseq
    %v1109 = vshrl.u32 %v1108, 7
    %v1110 = vsub.s32 %v1107, %v1109
    %v1111 = vrot.slane %v1103, %v1110
    %v1113 = vunpack.c.l.s4 1983009808
    %v1114 = vunpack.c.0.s8 %v1113
    %v1115 = vlaneseq
    %v1116 = vshrl.u32 %v1115, 7
    %v1117 = vsub.s32 %v1114, %v1116
    %v1118 = vrot.slane %v1104, %v1117
    %v1119 = vcombine.low %v642, %v658
    %v1120 = vcombine.high %v642, %v658
    %v1122 = vunpack.c.l.s4 1983009808
    %v1123 = vunpack.c.0.s8 %v1122
    %v1124 = vlaneseq
    %v1125 = vshrl.u32 %v1124, 7
    %v1126 = vsub.s32 %v1123, %v1125
    %v1127 = vrot.slane %v1119, %v1126
    %v1129 = vunpack.c.l.s4 1983009808
    %v1130 = vunpack.c.0.s8 %v1129
    %v1131 = vlaneseq
    %v1132 = vshrl.u32 %v1131, 7
    %v1133 = vsub.s32 %v1130, %v1132
    %v1134 = vrot.slane %v1120, %v1133
    %v1135 = vcombine.low %v1079, %v1095
    %v1136 = vcombine.high %v1079, %v1095
    %v1138 = vunpack.c.l.s4 1934713408
    %v1139 = vunpack.c.0.s8 %v1138
    %v1140 = vlaneseq
    %v1141 = vshrl.u32 %v1140, 7
    %v1142 = vsub.s32 %v1139, %v1141
    %v1143 = vrot.slane %v1135, %v1142
    %v1145 = vunpack.c.l.s4 1934713408
    %v1146 = vunpack.c.0.s8 %v1145
    %v1147 = vlaneseq
    %v1148 = vshrl.u32 %v1147, 7
    %v1149 = vsub.s32 %v1146, %v1148
    %v1150 = vrot.slane %v1136, %v1149
    %v1151 = vcombine.low %v1086, %v1102
    %v1152 = vcombine.high %v1086, %v1102
    %v1154 = vunpack.c.l.s4 1934713408
    %v1155 = vunpack.c.0.s8 %v1154
    %v1156 = vlaneseq
    %v1157 = vshrl.u32 %v1156, 7
    %v1158 = vsub.s32 %v1155, %v1157
    %v1159 = vrot.slane %v1151, %v1158
    %v1161 = vunpack.c.l.s4 1934713408
    %v1162 = vunpack.c.0.s8 %v1161
    %v1163 = vlaneseq
    %v1164 = vshrl.u32 %v1163, 7
    %v1165 = vsub.s32 %v1162, %v1164
    %v1166 = vrot.slane %v1152, %v1165
    %v1167 = vcombine.low %v1111, %v1127
    %v1168 = vcombine.high %v1111, %v1127
    %v1170 = vunpack.c.l.s4 1934713408
    %v1171 = vunpack.c.0.s8 %v1170
    %v1172 = vlaneseq
    %v1173 = vshrl.u32 %v1172, 7
    %v1174 = vsub.s32 %v1171, %v1173
    %v1175 = vrot.slane %v1167, %v1174
    %v1177 = vunpack.c.l.s4 1934713408
    %v1178 = vunpack.c.0.s8 %v1177
    %v1179 = vlaneseq
    %v1180 = vshrl.u32 %v1179, 7
    %v1181 = vsub.s32 %v1178, %v1180
    %v1182 = vrot.slane %v1168, %v1181
    %v1183 = vcombine.low %v1118, %v1134
    %v1184 = vcombine.high %v1118, %v1134
    %v1186 = vunpack.c.l.s4 1934713408
    %v1187 = vunpack.c.0.s8 %v1186
    %v1188 = vlaneseq
    %v1189 = vshrl.u32 %v1188, 7
    %v1190 = vsub.s32 %v1187, %v1189
    %v1191 = vrot.slane %v1183, %v1190
    %v1193 = vunpack.c.l.s4 1934713408
    %v1194 = vunpack.c.0.s8 %v1193
    %v1195 = vlaneseq
    %v1196 = vshrl.u32 %v1195, 7
    %v1197 = vsub.s32 %v1194, %v1196
    %v1198 = vrot.slane %v1184, %v1197
    %v1199 = vcombine.low %v1143, %v1175
    %v1200 = vcombine.high %v1143, %v1175
    %v1201 = vcombine.low %v1150, %v1182
    %v1202 = vcombine.high %v1150, %v1182
    %v1203 = vcombine.low %v1159, %v1191
    %v1204 = vcombine.high %v1159, %v1191
    %v1205 = vcombine.low %v1166, %v1198
    %v1206 = vcombine.high %v1166, %v1198
    %v1207 = vcombine.low %v603, %v619
    %v1208 = vcombine.high %v603, %v619
    %v1210 = vunpack.c.l.s4 1983009808
    %v1211 = vunpack.c.0.s8 %v1210
    %v1212 = vlaneseq
    %v1213 = vshrl.u32 %v1212, 7
    %v1214 = vsub.s32 %v1211, %v1213
    %v1215 = vrot.slane %v1207, %v1214
    %v1217 = vunpack.c.l.s4 1983009808
    %v1218 = vunpack.c.0.s8 %v1217
    %v1219 = vlaneseq
    %v1220 = vshrl.u32 %v1219, 7
    %v1221 = vsub.s32 %v1218, %v1220
    %v1222 = vrot.slane %v1208, %v1221
    %v1223 = vcombine.low %v611, %v627
    %v1224 = vcombine.high %v611, %v627
    %v1226 = vunpack.c.l.s4 1983009808
    %v1227 = vunpack.c.0.s8 %v1226
    %v1228 = vlaneseq
    %v1229 = vshrl.u32 %v1228, 7
    %v1230 = vsub.s32 %v1227, %v1229
    %v1231 = vrot.slane %v1223, %v1230
    %v1233 = vunpack.c.l.s4 1983009808
    %v1234 = vunpack.c.0.s8 %v1233
    %v1235 = vlaneseq
    %v1236 = vshrl.u32 %v1235, 7
    %v1237 = vsub.s32 %v1234, %v1236
    %v1238 = vrot.slane %v1224, %v1237
    %v1239 = vcombine.low %v635, %v651
    %v1240 = vcombine.high %v635, %v651
    %v1242 = vunpack.c.l.s4 1983009808
    %v1243 = vunpack.c.0.s8 %v1242
    %v1244 = vlaneseq
    %v1245 = vshrl.u32 %v1244, 7
    %v1246 = vsub.s32 %v1243, %v1245
    %v1247 = vrot.slane %v1239, %v1246
    %v1249 = vunpack.c.l.s4 1983009808
    %v1250 = vunpack.c.0.s8 %v1249
    %v1251 = vlaneseq
    %v1252 = vshrl.u32 %v1251, 7
    %v1253 = vsub.s32 %v1250, %v1252
    %v1254 = vrot.slane %v1240, %v1253
    %v1255 = vcombine.low %v643, %v659
    %v1256 = vcombine.high %v643, %v659
    %v1258 = vunpack.c.l.s4 1983009808
    %v1259 = vunpack.c.0.s8 %v1258
    %v1260 = vlaneseq
    %v1261 = vshrl.u32 %v1260, 7
    %v1262 = vsub.s32 %v1259, %v1261
    %v1263 = vrot.slane %v1255, %v1262
    %v1265 = vunpack.c.l.s4 1983009808
    %v1266 = vunpack.c.0.s8 %v1265
    %v1267 = vlaneseq
    %v1268 = vshrl.u32 %v1267, 7
    %v1269 = vsub.s32 %v1266, %v1268
    %v1270 = vrot.slane %v1256, %v1269
    %v1271 = vcombine.low %v1215, %v1231
    %v1272 = vcombine.high %v1215, %v1231
    %v1274 = vunpack.c.l.s4 1934713408
    %v1275 = vunpack.c.0.s8 %v1274
    %v1276 = vlaneseq
    %v1277 = vshrl.u32 %v1276, 7
    %v1278 = vsub.s32 %v1275, %v1277
    %v1279 = vrot.slane %v1271, %v1278
    %v1281 = vunpack.c.l.s4 1934713408
    %v1282 = vunpack.c.0.s8 %v1281
    %v1283 = vlaneseq
    %v1284 = vshrl.u32 %v1283, 7
    %v1285 = vsub.s32 %v1282, %v1284
    %v1286 = vrot.slane %v1272, %v1285
    %v1287 = vcombine.low %v1222, %v1238
    %v1288 = vcombine.high %v1222, %v1238
    %v1290 = vunpack.c.l.s4 1934713408
    %v1291 = vunpack.c.0.s8 %v1290
    %v1292 = vlaneseq
    %v1293 = vshrl.u32 %v1292, 7
    %v1294 = vsub.s32 %v1291, %v1293
    %v1295 = vrot.slane %v1287, %v1294
    %v1297 = vunpack.c.l.s4 1934713408
    %v1298 = vunpack.c.0.s8 %v1297
    %v1299 = vlaneseq
    %v1300 = vshrl.u32 %v1299, 7
    %v1301 = vsub.s32 %v1298, %v1300
    %v1302 = vrot.slane %v1288, %v1301
    %v1303 = vcombine.low %v1247, %v1263
    %v1304 = vcombine.high %v1247, %v1263
    %v1306 = vunpack.c.l.s4 1934713408
    %v1307 = vunpack.c.0.s8 %v1306
    %v1308 = vlaneseq
    %v1309 = vshrl.u32 %v1308, 7
    %v1310 = vsub.s32 %v1307, %v1309
    %v1311 = vrot.slane %v1303, %v1310
    %v1313 = vunpack.c.l.s4 1934713408
    %v1314 = vunpack.c.0.s8 %v1313
    %v1315 = vlaneseq
    %v1316 = vshrl.u32 %v1315, 7
    %v1317 = vsub.s32 %v1314, %v1316
    %v1318 = vrot.slane %v1304, %v1317
    %v1319 = vcombine.low %v1254, %v1270
    %v1320 = vcombine.high %v1254, %v1270
    %v1322 = vunpack.c.l.s4 1934713408
    %v1323 = vunpack.c.0.s8 %v1322
    %v1324 = vlaneseq
    %v1325 = vshrl.u32 %v1324, 7
    %v1326 = vsub.s32 %v1323, %v1325
    %v1327 = vrot.slane %v1319, %v1326
    %v1329 = vunpack.c.l.s4 1934713408
    %v1330 = vunpack.c.0.s8 %v1329
    %v1331 = vlaneseq
    %v1332 = vshrl.u32 %v1331, 7
    %v1333 = vsub.s32 %v1330, %v1332
    %v1334 = vrot.slane %v1320, %v1333
    %v1335 = vcombine.low %v1279, %v1311
    %v1336 = vcombine.high %v1279, %v1311
    %v1337 = vcombine.low %v1286, %v1318
    %v1338 = vcombine.high %v1286, %v1318
    %v1339 = vcombine.low %v1295, %v1327
    %v1340 = vcombine.high %v1295, %v1327
    %v1341 = vcombine.low %v1302, %v1334
    %v1342 = vcombine.high %v1302, %v1334
    %v1343 = vcombine.low %v604, %v620
    %v1344 = vcombine.high %v604, %v620
    %v1346 = vunpack.c.l.s4 1983009808
    %v1347 = vunpack.c.0.s8 %v1346
    %v1348 = vlaneseq
    %v1349 = vshrl.u32 %v1348, 7
    %v1350 = vsub.s32 %v1347, %v1349
    %v1351 = vrot.slane %v1343, %v1350
    %v1353 = vunpack.c.l.s4 1983009808
    %v1354 = vunpack.c.0.s8 %v1353
    %v1355 = vlaneseq
    %v1356 = vshrl.u32 %v1355, 7
    %v1357 = vsub.s32 %v1354, %v1356
    %v1358 = vrot.slane %v1344, %v1357
    %v1359 = vcombine.low %v612, %v628
    %v1360 = vcombine.high %v612, %v628
    %v1362 = vunpack.c.l.s4 1983009808
    %v1363 = vunpack.c.0.s8 %v1362
    %v1364 = vlaneseq
    %v1365 = vshrl.u32 %v1364, 7
    %v1366 = vsub.s32 %v1363, %v1365
    %v1367 = vrot.slane %v1359, %v1366
    %v1369 = vunpack.c.l.s4 1983009808
    %v1370 = vunpack.c.0.s8 %v1369
    %v1371 = vlaneseq
    %v1372 = vshrl.u32 %v1371, 7
    %v1373 = vsub.s32 %v1370, %v1372
    %v1374 = vrot.slane %v1360, %v1373
    %v1375 = vcombine.low %v636, %v652
    %v1376 = vcombine.high %v636, %v652
    %v1378 = vunpack.c.l.s4 1983009808
    %v1379 = vunpack.c.0.s8 %v1378
    %v1380 = vlaneseq
    %v1381 = vshrl.u32 %v1380, 7
    %v1382 = vsub.s32 %v1379, %v1381
    %v1383 = vrot.slane %v1375, %v1382
    %v1385 = vunpack.c.l.s4 1983009808
    %v1386 = vunpack.c.0.s8 %v1385
    %v1387 = vlaneseq
    %v1388 = vshrl.u32 %v1387, 7
    %v1389 = vsub.s32 %v1386, %v1388
    %v1390 = vrot.slane %v1376, %v1389
    %v1391 = vcombine.low %v644, %v660
    %v1392 = vcombine.high %v644, %v660
    %v1394 = vunpack.c.l.s4 1983009808
    %v1395 = vunpack.c.0.s8 %v1394
    %v1396 = vlaneseq
    %v1397 = vshrl.u32 %v1396, 7
    %v1398 = vsub.s32 %v1395, %v1397
    %v1399 = vrot.slane %v1391, %v1398
    %v1401 = vunpack.c.l.s4 1983009808
    %v1402 = vunpack.c.0.s8 %v1401
    %v1403 = vlaneseq
    %v1404 = vshrl.u32 %v1403, 7
    %v1405 = vsub.s32 %v1402, %v1404
    %v1406 = vrot.slane %v1392, %v1405
    %v1407 = vcombine.low %v1351, %v1367
    %v1408 = vcombine.high %v1351, %v1367
    %v1410 = vunpack.c.l.s4 1934713408
    %v1411 = vunpack.c.0.s8 %v1410
    %v1412 = vlaneseq
    %v1413 = vshrl.u32 %v1412, 7
    %v1414 = vsub.s32 %v1411, %v1413
    %v1415 = vrot.slane %v1407, %v1414
    %v1417 = vunpack.c.l.s4 1934713408
    %v1418 = vunpack.c.0.s8 %v1417
    %v1419 = vlaneseq
    %v1420 = vshrl.u32 %v1419, 7
    %v1421 = vsub.s32 %v1418, %v1420
    %v1422 = vrot.slane %v1408, %v1421
    %v1423 = vcombine.low %v1358, %v1374
    %v1424 = vcombine.high %v1358, %v1374
    %v1426 = vunpack.c.l.s4 1934713408
    %v1427 = vunpack.c.0.s8 %v1426
    %v1428 = vlaneseq
    %v1429 = vshrl.u32 %v1428, 7
    %v1430 = vsub.s32 %v1427, %v1429
    %v1431 = vrot.slane %v1423, %v1430
    %v1433 = vunpack.c.l.s4 1934713408
    %v1434 = vunpack.c.0.s8 %v1433
    %v1435 = vlaneseq
    %v1436 = vshrl.u32 %v1435, 7
    %v1437 = vsub.s32 %v1434, %v1436
    %v1438 = vrot.slane %v1424, %v1437
    %v1439 = vcombine.low %v1383, %v1399
    %v1440 = vcombine.high %v1383, %v1399
    %v1442 = vunpack.c.l.s4 1934713408
    %v1443 = vunpack.c.0.s8 %v1442
    %v1444 = vlaneseq
    %v1445 = vshrl.u32 %v1444, 7
    %v1446 = vsub.s32 %v1443, %v1445
    %v1447 = vrot.slane %v1439, %v1446
    %v1449 = vunpack.c.l.s4 1934713408
    %v1450 = vunpack.c.0.s8 %v1449
    %v1451 = vlaneseq
    %v1452 = vshrl.u32 %v1451, 7
    %v1453 = vsub.s32 %v1450, %v1452
    %v1454 = vrot.slane %v1440, %v1453
    %v1455 = vcombine.low %v1390, %v1406
    %v1456 = vcombine.high %v1390, %v1406
    %v1458 = vunpack.c.l.s4 1934713408
    %v1459 = vunpack.c.0.s8 %v1458
    %v1460 = vlaneseq
    %v1461 = vshrl.u32 %v1460, 7
    %v1462 = vsub.s32 %v1459, %v1461
    %v1463 = vrot.slane %v1455, %v1462
    %v1465 = vunpack.c.l.s4 1934713408
    %v1466 = vunpack.c.0.s8 %v1465
    %v1467 = vlaneseq
    %v1468 = vshrl.u32 %v1467, 7
    %v1469 = vsub.s32 %v1466, %v1468
    %v1470 = vrot.slane %v1456, %v1469
    %v1471 = vcombine.low %v1415, %v1447
    %v1472 = vcombine.high %v1415, %v1447
    %v1473 = vcombine.low %v1422, %v1454
    %v1474 = vcombine.high %v1422, %v1454
    %v1475 = vcombine.low %v1431, %v1463
    %v1476 = vcombine.high %v1431, %v1463
    %v1477 = vcombine.low %v1438, %v1470
    %v1478 = vcombine.high %v1438, %v1470
    %v1479 = vcombine.low %v605, %v621
    %v1480 = vcombine.high %v605, %v621
    %v1482 = vunpack.c.l.s4 1983009808
    %v1483 = vunpack.c.0.s8 %v1482
    %v1484 = vlaneseq
    %v1485 = vshrl.u32 %v1484, 7
    %v1486 = vsub.s32 %v1483, %v1485
    %v1487 = vrot.slane %v1479, %v1486
    %v1489 = vunpack.c.l.s4 1983009808
    %v1490 = vunpack.c.0.s8 %v1489
    %v1491 = vlaneseq
    %v1492 = vshrl.u32 %v1491, 7
    %v1493 = vsub.s32 %v1490, %v1492
    %v1494 = vrot.slane %v1480, %v1493
    %v1495 = vcombine.low %v613, %v629
    %v1496 = vcombine.high %v613, %v629
    %v1498 = vunpack.c.l.s4 1983009808
    %v1499 = vunpack.c.0.s8 %v1498
    %v1500 = vlaneseq
    %v1501 = vshrl.u32 %v1500, 7
    %v1502 = vsub.s32 %v1499, %v1501
    %v1503 = vrot.slane %v1495, %v1502
    %v1505 = vunpack.c.l.s4 1983009808
    %v1506 = vunpack.c.0.s8 %v1505
    %v1507 = vlaneseq
    %v1508 = vshrl.u32 %v1507, 7
    %v1509 = vsub.s32 %v1506, %v1508
    %v1510 = vrot.slane %v1496, %v1509
    %v1511 = vcombine.low %v637, %v653
    %v1512 = vcombine.high %v637, %v653
    %v1514 = vunpack.c.l.s4 1983009808
    %v1515 = vunpack.c.0.s8 %v1514
    %v1516 = vlaneseq
    %v1517 = vshrl.u32 %v1516, 7
    %v1518 = vsub.s32 %v1515, %v1517
    %v1519 = vrot.slane %v1511, %v1518
    %v1521 = vunpack.c.l.s4 1983009808
    %v1522 = vunpack.c.0.s8 %v1521
    %v1523 = vlaneseq
    %v1524 = vshrl.u32 %v1523, 7
    %v1525 = vsub.s32 %v1522, %v1524
    %v1526 = vrot.slane %v1512, %v1525
    %v1527 = vcombine.low %v645, %v661
    %v1528 = vcombine.high %v645, %v661
    %v1530 = vunpack.c.l.s4 1983009808
    %v1531 = vunpack.c.0.s8 %v1530
    %v1532 = vlaneseq
    %v1533 = vshrl.u32 %v1532, 7
    %v1534 = vsub.s32 %v1531, %v1533
    %v1535 = vrot.slane %v1527, %v1534
    %v1537 = vunpack.c.l.s4 1983009808
    %v1538 = vunpack.c.0.s8 %v1537
    %v1539 = vlaneseq
    %v1540 = vshrl.u32 %v1539, 7
    %v1541 = vsub.s32 %v1538, %v1540
    %v1542 = vrot.slane %v1528, %v1541
    %v1543 = vcombine.low %v1487, %v1503
    %v1544 = vcombine.high %v1487, %v1503
    %v1546 = vunpack.c.l.s4 1934713408
    %v1547 = vunpack.c.0.s8 %v1546
    %v1548 = vlaneseq
    %v1549 = vshrl.u32 %v1548, 7
    %v1550 = vsub.s32 %v1547, %v1549
    %v1551 = vrot.slane %v1543, %v1550
    %v1553 = vunpack.c.l.s4 1934713408
    %v1554 = vunpack.c.0.s8 %v1553
    %v1555 = vlaneseq
    %v1556 = vshrl.u32 %v1555, 7
    %v1557 = vsub.s32 %v1554, %v1556
    %v1558 = vrot.slane %v1544, %v1557
    %v1559 = vcombine.low %v1494, %v1510
    %v1560 = vcombine.high %v1494, %v1510
    %v1562 = vunpack.c.l.s4 1934713408
    %v1563 = vunpack.c.0.s8 %v1562
    %v1564 = vlaneseq
    %v1565 = vshrl.u32 %v1564, 7
    %v1566 = vsub.s32 %v1563, %v1565
    %v1567 = vrot.slane %v1559, %v1566
    %v1569 = vunpack.c.l.s4 1934713408
    %v1570 = vunpack.c.0.s8 %v1569
    %v1571 = vlaneseq
    %v1572 = vshrl.u32 %v1571, 7
    %v1573 = vsub.s32 %v1570, %v1572
    %v1574 = vrot.slane %v1560, %v1573
    %v1575 = vcombine.low %v1519, %v1535
    %v1576 = vcombine.high %v1519, %v1535
    %v1578 = vunpack.c.l.s4 1934713408
    %v1579 = vunpack.c.0.s8 %v1578
    %v1580 = vlaneseq
    %v1581 = vshrl.u32 %v1580, 7
    %v1582 = vsub.s32 %v1579, %v1581
    %v1583 = vrot.slane %v1575, %v1582
    %v1585 = vunpack.c.l.s4 1934713408
    %v1586 = vunpack.c.0.s8 %v1585
    %v1587 = vlaneseq
    %v1588 = vshrl.u32 %v1587, 7
    %v1589 = vsub.s32 %v1586, %v1588
    %v1590 = vrot.slane %v1576, %v1589
    %v1591 = vcombine.low %v1526, %v1542
    %v1592 = vcombine.high %v1526, %v1542
    %v1594 = vunpack.c.l.s4 1934713408
    %v1595 = vunpack.c.0.s8 %v1594
    %v1596 = vlaneseq
    %v1597 = vshrl.u32 %v1596, 7
    %v1598 = vsub.s32 %v1595, %v1597
    %v1599 = vrot.slane %v1591, %v1598
    %v1601 = vunpack.c.l.s4 1934713408
    %v1602 = vunpack.c.0.s8 %v1601
    %v1603 = vlaneseq
    %v1604 = vshrl.u32 %v1603, 7
    %v1605 = vsub.s32 %v1602, %v1604
    %v1606 = vrot.slane %v1592, %v1605
    %v1607 = vcombine.low %v1551, %v1583
    %v1608 = vcombine.high %v1551, %v1583
    %v1609 = vcombine.low %v1558, %v1590
    %v1610 = vcombine.high %v1558, %v1590
    %v1611 = vcombine.low %v1567, %v1599
    %v1612 = vcombine.high %v1567, %v1599
    %v1613 = vcombine.low %v1574, %v1606
    %v1614 = vcombine.high %v1574, %v1606
    %v1615 = vcombine.low %v606, %v622
    %v1616 = vcombine.high %v606, %v622
    %v1618 = vunpack.c.l.s4 1983009808
    %v1619 = vunpack.c.0.s8 %v1618
    %v1620 = vlaneseq
    %v1621 = vshrl.u32 %v1620, 7
    %v1622 = vsub.s32 %v1619, %v1621
    %v1623 = vrot.slane %v1615, %v1622
    %v1625 = vunpack.c.l.s4 1983009808
    %v1626 = vunpack.c.0.s8 %v1625
    %v1627 = vlaneseq
    %v1628 = vshrl.u32 %v1627, 7
    %v1629 = vsub.s32 %v1626, %v1628
    %v1630 = vrot.slane %v1616, %v1629
    %v1631 = vcombine.low %v614, %v630
    %v1632 = vcombine.high %v614, %v630
    %v1634 = vunpack.c.l.s4 1983009808
    %v1635 = vunpack.c.0.s8 %v1634
    %v1636 = vlaneseq
    %v1637 = vshrl.u32 %v1636, 7
    %v1638 = vsub.s32 %v1635, %v1637
    %v1639 = vrot.slane %v1631, %v1638
    %v1641 = vunpack.c.l.s4 1983009808
    %v1642 = vunpack.c.0.s8 %v1641
    %v1643 = vlaneseq
    %v1644 = vshrl.u32 %v1643, 7
    %v1645 = vsub.s32 %v1642, %v1644
    %v1646 = vrot.slane %v1632, %v1645
    %v1647 = vcombine.low %v638, %v654
    %v1648 = vcombine.high %v638, %v654
    %v1650 = vunpack.c.l.s4 1983009808
    %v1651 = vunpack.c.0.s8 %v1650
    %v1652 = vlaneseq
    %v1653 = vshrl.u32 %v1652, 7
    %v1654 = vsub.s32 %v1651, %v1653
    %v1655 = vrot.slane %v1647, %v1654
    %v1657 = vunpack.c.l.s4 1983009808
    %v1658 = vunpack.c.0.s8 %v1657
    %v1659 = vlaneseq
    %v1660 = vshrl.u32 %v1659, 7
    %v1661 = vsub.s32 %v1658, %v1660
    %v1662 = vrot.slane %v1648, %v1661
    %v1663 = vcombine.low %v646, %v662
    %v1664 = vcombine.high %v646, %v662
    %v1666 = vunpack.c.l.s4 1983009808
    %v1667 = vunpack.c.0.s8 %v1666
    %v1668 = vlaneseq
    %v1669 = vshrl.u32 %v1668, 7
    %v1670 = vsub.s32 %v1667, %v1669
    %v1671 = vrot.slane %v1663, %v1670
    %v1673 = vunpack.c.l.s4 1983009808
    %v1674 = vunpack.c.0.s8 %v1673
    %v1675 = vlaneseq
    %v1676 = vshrl.u32 %v1675, 7
    %v1677 = vsub.s32 %v1674, %v1676
    %v1678 = vrot.slane %v1664, %v1677
    %v1679 = vcombine.low %v1623, %v1639
    %v1680 = vcombine.high %v1623, %v1639
    %v1682 = vunpack.c.l.s4 1934713408
    %v1683 = vunpack.c.0.s8 %v1682
    %v1684 = vlaneseq
    %v1685 = vshrl.u32 %v1684, 7
    %v1686 = vsub.s32 %v1683, %v1685
    %v1687 = vrot.slane %v1679, %v1686
    %v1689 = vunpack.c.l.s4 1934713408
    %v1690 = vunpack.c.0.s8 %v1689
    %v1691 = vlaneseq
    %v1692 = vshrl.u32 %v1691, 7
    %v1693 = vsub.s32 %v1690, %v1692
    %v1694 = vrot.slane %v1680, %v1693
    %v1695 = vcombine.low %v1630, %v1646
    %v1696 = vcombine.high %v1630, %v1646
    %v1698 = vunpack.c.l.s4 1934713408
    %v1699 = vunpack.c.0.s8 %v1698
    %v1700 = vlaneseq
    %v1701 = vshrl.u32 %v1700, 7
    %v1702 = vsub.s32 %v1699, %v1701
    %v1703 = vrot.slane %v1695, %v1702
    %v1705 = vunpack.c.l.s4 1934713408
    %v1706 = vunpack.c.0.s8 %v1705
    %v1707 = vlaneseq
    %v1708 = vshrl.u32 %v1707, 7
    %v1709 = vsub.s32 %v1706, %v1708
    %v1710 = vrot.slane %v1696, %v1709
    %v1711 = vcombine.low %v1655, %v1671
    %v1712 = vcombine.high %v1655, %v1671
    %v1714 = vunpack.c.l.s4 1934713408
    %v1715 = vunpack.c.0.s8 %v1714
    %v1716 = vlaneseq
    %v1717 = vshrl.u32 %v1716, 7
    %v1718 = vsub.s32 %v1715, %v1717
    %v1719 = vrot.slane %v1711, %v1718
    %v1721 = vunpack.c.l.s4 1934713408
    %v1722 = vunpack.c.0.s8 %v1721
    %v1723 = vlaneseq
    %v1724 = vshrl.u32 %v1723, 7
    %v1725 = vsub.s32 %v1722, %v1724
    %v1726 = vrot.slane %v1712, %v1725
    %v1727 = vcombine.low %v1662, %v1678
    %v1728 = vcombine.high %v1662, %v1678
    %v1730 = vunpack.c.l.s4 1934713408
    %v1731 = vunpack.c.0.s8 %v1730
    %v1732 = vlaneseq
    %v1733 = vshrl.u32 %v1732, 7
    %v1734 = vsub.s32 %v1731, %v1733
    %v1735 = vrot.slane %v1727, %v1734
    %v1737 = vunpack.c.l.s4 1934713408
    %v1738 = vunpack.c.0.s8 %v1737
    %v1739 = vlaneseq
    %v1740 = vshrl.u32 %v1739, 7
    %v1741 = vsub.s32 %v1738, %v1740
    %v1742 = vrot.slane %v1728, %v1741
    %v1743 = vcombine.low %v1687, %v1719
    %v1744 = vcombine.high %v1687, %v1719
    %v1745 = vcombine.low %v1694, %v1726
    %v1746 = vcombine.high %v1694, %v1726
    %v1747 = vcombine.low %v1703, %v1735
    %v1748 = vcombine.high %v1703, %v1735
    %v1749 = vcombine.low %v1710, %v1742
    %v1750 = vcombine.high %v1710, %v1742
    %1752 = vrot.lane.b32.xlu0 %v792, 2
    %v1753 = vpop.permute.xlu0 %1752
    %1756 = vrot.lane.b32.xlu0 %v793, 4
    %v1757 = vpop.permute.xlu0 %1756
    %1760 = vrot.lane.b32.xlu0 %v794, 6
    %v1761 = vpop.permute.xlu0 %1760
    %1764 = vrot.lane.b32.xlu0 %v795, 8
    %v1765 = vpop.permute.xlu0 %1764
    %1768 = vrot.lane.b32.xlu0 %v796, 10
    %v1769 = vpop.permute.xlu0 %1768
    %1772 = vrot.lane.b32.xlu0 %v797, 12
    %v1773 = vpop.permute.xlu0 %1772
    %1776 = vrot.lane.b32.xlu0 %v798, 14
    %v1777 = vpop.permute.xlu0 %1776
    %1780 = vrot.lane.b32.xlu0 %v927, 16
    %v1781 = vpop.permute.xlu0 %1780
    %1784 = vrot.lane.b32.xlu0 %v928, 18
    %v1785 = vpop.permute.xlu0 %1784
    %1788 = vrot.lane.b32.xlu0 %v929, 20
    %v1789 = vpop.permute.xlu0 %1788
    %1792 = vrot.lane.b32.xlu0 %v930, 22
    %v1793 = vpop.permute.xlu0 %1792
    %1796 = vrot.lane.b32.xlu0 %v931, 24
    %v1797 = vpop.permute.xlu0 %1796
    %1800 = vrot.lane.b32.xlu0 %v932, 26
    %v1801 = vpop.permute.xlu0 %1800
    %1804 = vrot.lane.b32.xlu0 %v933, 28
    %v1805 = vpop.permute.xlu0 %1804
    %1808 = vrot.lane.b32.xlu0 %v934, 30
    %v1809 = vpop.permute.xlu0 %1808
    %1812 = vrot.lane.b32.xlu0 %v1063, 32
    %v1813 = vpop.permute.xlu0 %1812
    %1816 = vrot.lane.b32.xlu0 %v1064, 34
    %v1817 = vpop.permute.xlu0 %1816
    %1820 = vrot.lane.b32.xlu0 %v1065, 36
    %v1821 = vpop.permute.xlu0 %1820
    %1824 = vrot.lane.b32.xlu0 %v1066, 38
    %v1825 = vpop.permute.xlu0 %1824
    %1828 = vrot.lane.b32.xlu0 %v1067, 40
    %v1829 = vpop.permute.xlu0 %1828
    %1832 = vrot.lane.b32.xlu0 %v1068, 42
    %v1833 = vpop.permute.xlu0 %1832
    %1836 = vrot.lane.b32.xlu0 %v1069, 44
    %v1837 = vpop.permute.xlu0 %1836
    %1840 = vrot.lane.b32.xlu0 %v1070, 46
    %v1841 = vpop.permute.xlu0 %1840
    %1844 = vrot.lane.b32.xlu0 %v1199, 48
    %v1845 = vpop.permute.xlu0 %1844
    %1848 = vrot.lane.b32.xlu0 %v1200, 50
    %v1849 = vpop.permute.xlu0 %1848
    %1852 = vrot.lane.b32.xlu0 %v1201, 52
    %v1853 = vpop.permute.xlu0 %1852
    %1856 = vrot.lane.b32.xlu0 %v1202, 54
    %v1857 = vpop.permute.xlu0 %1856
    %1860 = vrot.lane.b32.xlu0 %v1203, 56
    %v1861 = vpop.permute.xlu0 %1860
    %1864 = vrot.lane.b32.xlu0 %v1204, 58
    %v1865 = vpop.permute.xlu0 %1864
    %1868 = vrot.lane.b32.xlu0 %v1205, 60
    %v1869 = vpop.permute.xlu0 %1868
    %1872 = vrot.lane.b32.xlu0 %v1206, 62
    %v1873 = vpop.permute.xlu0 %1872
    %1876 = vrot.lane.b32.xlu0 %v1335, 64
    %v1877 = vpop.permute.xlu0 %1876
    %1880 = vrot.lane.b32.xlu0 %v1336, 66
    %v1881 = vpop.permute.xlu0 %1880
    %1884 = vrot.lane.b32.xlu0 %v1337, 68
    %v1885 = vpop.permute.xlu0 %1884
    %1888 = vrot.lane.b32.xlu0 %v1338, 70
    %v1889 = vpop.permute.xlu0 %1888
    %1892 = vrot.lane.b32.xlu0 %v1339, 72
    %v1893 = vpop.permute.xlu0 %1892
    %1896 = vrot.lane.b32.xlu0 %v1340, 74
    %v1897 = vpop.permute.xlu0 %1896
    %1900 = vrot.lane.b32.xlu0 %v1341, 76
    %v1901 = vpop.permute.xlu0 %1900
    %1904 = vrot.lane.b32.xlu0 %v1342, 78
    %v1905 = vpop.permute.xlu0 %1904
    %1908 = vrot.lane.b32.xlu0 %v1471, 80
    %v1909 = vpop.permute.xlu0 %1908
    %1912 = vrot.lane.b32.xlu0 %v1472, 82
    %v1913 = vpop.permute.xlu0 %1912
    %1916 = vrot.lane.b32.xlu0 %v1473, 84
    %v1917 = vpop.permute.xlu0 %1916
    %1920 = vrot.lane.b32.xlu0 %v1474, 86
    %v1921 = vpop.permute.xlu0 %1920
    %1924 = vrot.lane.b32.xlu0 %v1475, 88
    %v1925 = vpop.permute.xlu0 %1924
    %1928 = vrot.lane.b32.xlu0 %v1476, 90
    %v1929 = vpop.permute.xlu0 %1928
    %1932 = vrot.lane.b32.xlu0 %v1477, 92
    %v1933 = vpop.permute.xlu0 %1932
    %1936 = vrot.lane.b32.xlu0 %v1478, 94
    %v1937 = vpop.permute.xlu0 %1936
    %1940 = vrot.lane.b32.xlu0 %v1607, 96
    %v1941 = vpop.permute.xlu0 %1940
    %1944 = vrot.lane.b32.xlu0 %v1608, 98
    %v1945 = vpop.permute.xlu0 %1944
    %1948 = vrot.lane.b32.xlu0 %v1609, 100
    %v1949 = vpop.permute.xlu0 %1948
    %1952 = vrot.lane.b32.xlu0 %v1610, 102
    %v1953 = vpop.permute.xlu0 %1952
    %1956 = vrot.lane.b32.xlu0 %v1611, 104
    %v1957 = vpop.permute.xlu0 %1956
    %1960 = vrot.lane.b32.xlu0 %v1612, 106
    %v1961 = vpop.permute.xlu0 %1960
    %1964 = vrot.lane.b32.xlu0 %v1613, 108
    %v1965 = vpop.permute.xlu0 %1964
    %1968 = vrot.lane.b32.xlu0 %v1614, 110
    %v1969 = vpop.permute.xlu0 %1968
    %1972 = vrot.lane.b32.xlu0 %v1743, 112
    %v1973 = vpop.permute.xlu0 %1972
    %1976 = vrot.lane.b32.xlu0 %v1744, 114
    %v1977 = vpop.permute.xlu0 %1976
    %1980 = vrot.lane.b32.xlu0 %v1745, 116
    %v1981 = vpop.permute.xlu0 %1980
    %1984 = vrot.lane.b32.xlu0 %v1746, 118
    %v1985 = vpop.permute.xlu0 %1984
    %1988 = vrot.lane.b32.xlu0 %v1747, 120
    %v1989 = vpop.permute.xlu0 %1988
    %1992 = vrot.lane.b32.xlu0 %v1748, 122
    %v1993 = vpop.permute.xlu0 %1992
    %1996 = vrot.lane.b32.xlu0 %v1749, 124
    %v1997 = vpop.permute.xlu0 %1996
    %2000 = vrot.lane.b32.xlu0 %v1750, 126
    %v2001 = vpop.permute.xlu0 %2000
    %vm2003 = vcmask 15360
    %v2004 = vsel %vm2003, %v791, %v1753
    %vm2005 = vcmask 31744
    %v2006 = vsel %vm2005, %v2004, %v1757
    %vm2007 = vcmask 48128
    %v2008 = vsel %vm2007, %v2006, %v1761
    %vm2009 = vcmask 64512
    %v2010 = vsel %vm2009, %v2008, %v1765
    %vm2011 = vcmask 80896
    %v2012 = vsel %vm2011, %v2010, %v1769
    %vm2013 = vcmask 97280
    %v2014 = vsel %vm2013, %v2012, %v1773
    %vm2015 = vcmask 113664
    %v2016 = vsel %vm2015, %v2014, %v1777
    %vm2017 = vcmask 130048
    %v2018 = vsel %vm2017, %v2016, %v1781
    %vm2019 = vcmask 146432
    %v2020 = vsel %vm2019, %v2018, %v1785
    %vm2021 = vcmask 162816
    %v2022 = vsel %vm2021, %v2020, %v1789
    %vm2023 = vcmask 179200
    %v2024 = vsel %vm2023, %v2022, %v1793
    %vm2025 = vcmask 195584
    %v2026 = vsel %vm2025, %v2024, %v1797
    %vm2027 = vcmask 211968
    %v2028 = vsel %vm2027, %v2026, %v1801
    %vm2029 = vcmask 228352
    %v2030 = vsel %vm2029, %v2028, %v1805
    %vm2031 = vcmask 244736
    %v2032 = vsel %vm2031, %v2030, %v1809
    %vm2033 = vcmask 261120
    %v2034 = vsel %vm2033, %v2032, %v1813
    %vm2035 = vcmask 277504
    %v2036 = vsel %vm2035, %v2034, %v1817
    %vm2037 = vcmask 293888
    %v2038 = vsel %vm2037, %v2036, %v1821
    %vm2039 = vcmask 310272
    %v2040 = vsel %vm2039, %v2038, %v1825
    %vm2041 = vcmask 326656
    %v2042 = vsel %vm2041, %v2040, %v1829
    %vm2043 = vcmask 343040
    %v2044 = vsel %vm2043, %v2042, %v1833
    %vm2045 = vcmask 359424
    %v2046 = vsel %vm2045, %v2044, %v1837
    %vm2047 = vcmask 375808
    %v2048 = vsel %vm2047, %v2046, %v1841
    %vm2049 = vcmask 392192
    %v2050 = vsel %vm2049, %v2048, %v1845
    %vm2051 = vcmask 408576
    %v2052 = vsel %vm2051, %v2050, %v1849
    %vm2053 = vcmask 424960
    %v2054 = vsel %vm2053, %v2052, %v1853
    %vm2055 = vcmask 441344
    %v2056 = vsel %vm2055, %v2054, %v1857
    %vm2057 = vcmask 457728
    %v2058 = vsel %vm2057, %v2056, %v1861
    %vm2059 = vcmask 474112
    %v2060 = vsel %vm2059, %v2058, %v1865
    %vm2061 = vcmask 490496
    %v2062 = vsel %vm2061, %v2060, %v1869
    %vm2063 = vcmask 506880
    %v2064 = vsel %vm2063, %v2062, %v1873
    %vm2065 = vcmask 523264
    %v2066 = vsel %vm2065, %v2064, %v1877
    %vm2067 = vcmask 539648
    %v2068 = vsel %vm2067, %v2066, %v1881
    %vm2069 = vcmask 556032
    %v2070 = vsel %vm2069, %v2068, %v1885
    %vm2071 = vcmask 572416
    %v2072 = vsel %vm2071, %v2070, %v1889
    %vm2073 = vcmask 588800
    %v2074 = vsel %vm2073, %v2072, %v1893
    %vm2075 = vcmask 605184
    %v2076 = vsel %vm2075, %v2074, %v1897
    %vm2077 = vcmask 621568
    %v2078 = vsel %vm2077, %v2076, %v1901
    %vm2079 = vcmask 637952
    %v2080 = vsel %vm2079, %v2078, %v1905
    %vm2081 = vcmask 654336
    %v2082 = vsel %vm2081, %v2080, %v1909
    %vm2083 = vcmask 670720
    %v2084 = vsel %vm2083, %v2082, %v1913
    %vm2085 = vcmask 687104
    %v2086 = vsel %vm2085, %v2084, %v1917
    %vm2087 = vcmask 703488
    %v2088 = vsel %vm2087, %v2086, %v1921
    %vm2089 = vcmask 719872
    %v2090 = vsel %vm2089, %v2088, %v1925
    %vm2091 = vcmask 736256
    %v2092 = vsel %vm2091, %v2090, %v1929
    %vm2093 = vcmask 752640
    %v2094 = vsel %vm2093, %v2092, %v1933
    %vm2095 = vcmask 769024
    %v2096 = vsel %vm2095, %v2094, %v1937
    %vm2097 = vcmask 785408
    %v2098 = vsel %vm2097, %v2096, %v1941
    %vm2099 = vcmask 801792
    %v2100 = vsel %vm2099, %v2098, %v1945
    %vm2101 = vcmask 818176
    %v2102 = vsel %vm2101, %v2100, %v1949
    %vm2103 = vcmask 834560
    %v2104 = vsel %vm2103, %v2102, %v1953
    %vm2105 = vcmask 850944
    %v2106 = vsel %vm2105, %v2104, %v1957
    %vm2107 = vcmask 867328
    %v2108 = vsel %vm2107, %v2106, %v1961
    %vm2109 = vcmask 883712
    %v2110 = vsel %vm2109, %v2108, %v1965
    %vm2111 = vcmask 900096
    %v2112 = vsel %vm2111, %v2110, %v1969
    %vm2113 = vcmask 916480
    %v2114 = vsel %vm2113, %v2112, %v1973
    %vm2115 = vcmask 932864
    %v2116 = vsel %vm2115, %v2114, %v1977
    %vm2117 = vcmask 949248
    %v2118 = vsel %vm2117, %v2116, %v1981
    %vm2119 = vcmask 965632
    %v2120 = vsel %vm2119, %v2118, %v1985
    %vm2121 = vcmask 982016
    %v2122 = vsel %vm2121, %v2120, %v1989
    %vm2123 = vcmask 998400
    %v2124 = vsel %vm2123, %v2122, %v1993
    %vm2125 = vcmask 1014784
    %v2126 = vsel %vm2125, %v2124, %v1997
    %vm2127 = vcmask 1031168
    %v2128 = vsel %vm2127, %v2126, %v2001
    %2129 = vst [vmem:[#allocation7] sm:$0xff] %v2128
    // Predicated region
    $region18: #{tpu_custom_call.1} parent=1 // pred_check
      _
    $region19: #{tpu_custom_call.1} parent=1 // pred_check_branch
      %2131 = sbr.rel (0) target = $region21
    $region20: #{tpu_custom_call.1} parent=1 // pred_region
      %s2133 = ssub.s32 128, 128
      %2134 = vsyncadd [#allocation4], %s2133
      %s2136 = sshll.u32 [#allocation7], 4
      %s2137 = int_to_ptr.vmem [resolvable:$true] %s2136
      %2139 = dma.vmem_to_hbm [thread:$0]  %s2137, 128, %s2, [#allocation4]
    $region21: #{tpu_custom_call.1} parent=1 // pred_fallthru
      _
    // Predicated region
    $region22: #{tpu_custom_call.1} parent=1 // pred_check
      _
    $region23: #{tpu_custom_call.1} parent=1 // pred_check_branch
      %2141 = sbr.rel (0) target = $region25
    $region24: #{tpu_custom_call.1} parent=1 // pred_region
      %2142 = dma.done [#allocation4], 128
    $region25: #{tpu_custom_call.1} parent=1 // pred_fallthru
      _
    %2143 = vsyncpa [#allocation3], 1
    %2144 = vsyncpa [#allocation6], 1
    %2145 = vsyncpa [#allocation4], 1

// kernel: tpu_custom_call.1
$region0: #{tpu_custom_call.1}
  #allocation0 [shape = 'u32[]', space=smem, size = 0x4, offset = 0x4, fixed_abs, tag = 'smem constant byte address 0x4 - core index']
  #allocation1 [shape = 'u32[144,128]{1,0:T(1,128)}', space=vmem, size = 0x12000, scoped, tag = 'internal scratch']
  #allocation2 [shape = 'f32[48,256]{1,0:T(8,128)}', space=vmem, size = 0xc000, scoped, tag = 'scratch operand']
  %s0 = inlined_call_operand.hbm [shape: f32[8,16,64], index: 0, kind: input, shape index: {}]
  %s1 = inlined_call_operand.vmem [shape: f32[16,48], index: 1, kind: input, shape index: {}]
  %s2 = inlined_call_operand.vmem [shape: f32[16,1], index: 2, kind: input, shape index: {}]
  %s3 = inlined_call_operand.hbm [shape: f32[8,8,128], index: 3, kind: output, shape index: {}]
  %s4 = sld [smem:[#allocation0]]
  $region49: #{tpu_custom_call.1} parent=0
    _
  %s6 = ssub.s32 1, %s4
  %s7 = scalar_select 0, %s6, %s4
  $region1: #{tpu_custom_call.1} parent=0
    #allocation3 [shape = 'u8[65536]{0}', space=vmem, size = 0x10000, scoped, tag = 'input window, operand 0']
    #allocation4 [shape = 's32[2]{0}', space=sflag, size = 0x8, scoped, tag = 'scoped memory for tpu_custom_call.1']
    #allocation5 [shape = 's32[2]{0}', space=sflag, size = 0x8, scoped, tag = 'scoped memory for tpu_custom_call.1']
    #allocation6 [shape = 'u8[32768]{0}', space=vmem, size = 0x8000, scoped, tag = 'output window, operand 0']
    %8 = vsyncpa [#allocation4], 0
    %s9 = scalar_lea.sflag [#allocation4], 1
    %10 = vsyncpa %s9, 0
    %11 = vsyncpa [#allocation5], 0
    %s12 = scalar_lea.sflag [#allocation5], 1
    %13 = vsyncpa %s12, 0
    loop: start=0, step=1, limit=4
    $region2: #{tpu_custom_call.1} parent=1 // loop_pre_header
      _
    $region3: #{tpu_custom_call.1} parent=1 // loop_header
      %s15 = sphi 0, %s19
      %p16 = scmp.ge.s32.totalorder %s15, 4
      %s25 = sphi 0, %s27
      %s28 = sphi 0, %s25
      %s29 = sphi 0, %s28
      %s45 = sphi 0, %s29
      %s49 = sphi 0, %s49
      %s51 = sphi 0, %s49
      %s52 = sphi 0, %s51
      %s66 = sphi 0, %s52
      %s70 = sphi 0, %s70
      %s72 = sphi 0, %s70
      %s73 = sphi 0, %s72
      %s87 = sphi 0, %s73
      %s93 = sphi 0, %s95
      %s96 = sphi 0, %s93
      %s97 = sphi 0, %s96
      %s113 = sphi 0, %s97
    $region4: #{tpu_custom_call.1} parent=1 // loop_header_branch
      %18 = sbr.rel (%p16) target = $region8
    $region5: #{tpu_custom_call.1} parent=1 // loop_body
      %s20 = ssub.s32 %s15, 1
      %s21 = ssub.s32 %s15, 2
      %s22 = sadd.s32 %s15, 1
      %s23 = ssub.s32 %s15, %s22
      %p24 = scmp.eq.s32.totalorder %s23, 0
      %s26 = sadd.s32 %s25, 1
      %s27 = scalar_select %p24, %s25, %s26
      %p30 = pneg %p24
      %p31 = scmp.eq.s32.totalorder %s15, 1
      %p32 = por %p30, %p31
      %p33 = scmp.ne.s32.totalorder %s25, %s28
      %p34 = scmp.eq.s32.totalorder %s15, 0
      %p35 = por %p33, %p34
      %p36 = scmp.ne.s32.totalorder %s25, %s28
      %p37 = scmp.eq.s32.totalorder %s20, 1
      %p38 = por %p36, %p37
      %p39 = scmp.ne.s32.totalorder %s28, %s29
      %p40 = scmp.eq.s32.totalorder %s20, 0
      %p41 = por %p39, %p40
      %p42 = scmp.ne.s32.totalorder %s28, %s29
      %p43 = scmp.eq.s32.totalorder %s21, 1
      %p44 = por %p42, %p43
      %p46 = scmp.ne.s32.totalorder %s29, %s45
      %p47 = scmp.eq.s32.totalorder %s21, 0
      %p48 = por %p46, %p47
      %s50 = sadd.s32 %s49, 1
      %p53 = scmp.eq.s32.totalorder %s15, 1
      %p54 = scmp.ne.s32.totalorder %s49, %s51
      %p55 = scmp.eq.s32.totalorder %s15, 0
      %p56 = por %p54, %p55
      %p57 = scmp.ne.s32.totalorder %s49, %s51
      %p58 = scmp.eq.s32.totalorder %s20, 1
      %p59 = por %p57, %p58
      %p60 = scmp.ne.s32.totalorder %s51, %s52
      %p61 = scmp.eq.s32.totalorder %s20, 0
      %p62 = por %p60, %p61
      %p63 = scmp.ne.s32.totalorder %s51, %s52
      %p64 = scmp.eq.s32.totalorder %s21, 1
      %p65 = por %p63, %p64
      %p67 = scmp.ne.s32.totalorder %s52, %s66
      %p68 = scmp.eq.s32.totalorder %s21, 0
      %p69 = por %p67, %p68
      %s71 = sadd.s32 %s70, 1
      %p74 = scmp.eq.s32.totalorder %s15, 1
      %p75 = scmp.ne.s32.totalorder %s70, %s72
      %p76 = scmp.eq.s32.totalorder %s15, 0
      %p77 = por %p75, %p76
      %p78 = scmp.ne.s32.totalorder %s70, %s72
      %p79 = scmp.eq.s32.totalorder %s20, 1
      %p80 = por %p78, %p79
      %p81 = scmp.ne.s32.totalorder %s72, %s73
      %p82 = scmp.eq.s32.totalorder %s20, 0
      %p83 = por %p81, %p82
      %p84 = scmp.ne.s32.totalorder %s72, %s73
      %p85 = scmp.eq.s32.totalorder %s21, 1
      %p86 = por %p84, %p85
      %p88 = scmp.ne.s32.totalorder %s73, %s87
      %p89 = scmp.eq.s32.totalorder %s21, 0
      %p90 = por %p88, %p89
      %s91 = ssub.s32 %s15, %s22
      %p92 = scmp.eq.s32.totalorder %s91, 0
      %s94 = sadd.s32 %s93, 1
      %s95 = scalar_select %p92, %s93, %s94
      %p98 = pneg %p92
      %p99 = scmp.eq.s32.totalorder %s15, 1
      %p100 = por %p98, %p99
      %p101 = scmp.ne.s32.totalorder %s93, %s96
      %p102 = scmp.eq.s32.totalorder %s15, 0
      %p103 = por %p101, %p102
      %p104 = scmp.ne.s32.totalorder %s93, %s96
      %p105 = scmp.eq.s32.totalorder %s20, 1
      %p106 = por %p104, %p105
      %p107 = scmp.ne.s32.totalorder %s96, %s97
      %p108 = scmp.eq.s32.totalorder %s20, 0
      %p109 = por %p107, %p108
      %p110 = scmp.ne.s32.totalorder %s96, %s97
      %p111 = scmp.eq.s32.totalorder %s21, 1
      %p112 = por %p110, %p111
      %p114 = scmp.ne.s32.totalorder %s97, %s113
      %p115 = scmp.eq.s32.totalorder %s21, 0
      %p116 = por %p114, %p115
      %p117 = scmp.le.s32.totalorder 1, %s15
      %p118 = scmp.lt.s32.totalorder %s15, 3
      %p119 = pnand %p117, %p118
      %p120 = pneg %p119
      // Predicated region
      $region9: #{tpu_custom_call.1} parent=5 // pred_check
        _
      $region10: #{tpu_custom_call.1} parent=5 // pred_check_branch
        %122 = sbr.rel (%p119) target = $region12
      $region11: #{tpu_custom_call.1} parent=5 // pred_region
        %s123 = ssub.s32 %s15, 1
        // Predicated region
        $region13: #{tpu_custom_call.1} parent=11 // pred_check
          %p124 = pneg %p62
        $region14: #{tpu_custom_call.1} parent=11 // pred_check_branch
          %126 = sbr.rel (%p124) target = $region16
        $region15: #{tpu_custom_call.1} parent=11 // pred_region
          _
        $region16: #{tpu_custom_call.1} parent=11 // pred_fallthru
          _
        // Predicated region
        $region17: #{tpu_custom_call.1} parent=11 // pred_check
          %p127 = pneg %p83
        $region18: #{tpu_custom_call.1} parent=11 // pred_check_branch
          %129 = sbr.rel (%p127) target = $region20
        $region19: #{tpu_custom_call.1} parent=11 // pred_region
          _
        $region20: #{tpu_custom_call.1} parent=11 // pred_fallthru
          _
      $region12: #{tpu_custom_call.1} parent=5 // pred_fallthru
        _
      %p130 = scmp.lt.s32.totalorder %s15, 2
      // Predicated region
      $region21: #{tpu_custom_call.1} parent=5 // pred_check
        %p131 = pneg %p130
      $region22: #{tpu_custom_call.1} parent=5 // pred_check_branch
        %133 = sbr.rel (%p131) target = $region24
      $region23: #{tpu_custom_call.1} parent=5 // pred_region
        // Predicated region
        $region25: #{tpu_custom_call.1} parent=23 // pred_check
          %p134 = pneg %p35
        $region26: #{tpu_custom_call.1} parent=23 // pred_check_branch
          %136 = sbr.rel (%p134) target = $region28
        $region27: #{tpu_custom_call.1} parent=23 // pred_region
          %s137 = sand.u32 %s25, 1
          %s138 = scalar_lea.sflag [#allocation4], %s137
          %s139 = sand.u32 %s25, 1
          %s140 = smul.addr %s139, 64
          %s141 = scalar_lea.vmem [#allocation3], %s140
          %s142 = smul.u32 4, %s15
          %s144 = ssub.s32 1024, 1024
          %145 = vsyncadd %s138, %s144
          %s146 = smul.addr %s142, 2
          %s147 = smul.addr %s146, 128
          %s148 = scalar_lea.hbm %s0, %s147
          %s149 = sshll.u32 %s141, 4
          %s150 = int_to_ptr.vmem [resolvable:$true] %s149
          %155 = dma.hbm_to_vmem [thread:$0]  %s148, 1024, %s150, %s138, 128, 128, 8
        $region28: #{tpu_custom_call.1} parent=23 // pred_fallthru
          _
      $region24: #{tpu_custom_call.1} parent=5 // pred_fallthru
        _
      %p156 = scmp.le.s32.totalorder 1, %s15
      %p157 = scmp.lt.s32.totalorder %s15, 3
      %p158 = pnand %p156, %p157
      %p159 = pneg %p158
      // Predicated region
      $region29: #{tpu_custom_call.1} parent=5 // pred_check
        _
      $region30: #{tpu_custom_call.1} parent=5 // pred_check_branch
        %161 = sbr.rel (%p158) target = $region32
      $region31: #{tpu_custom_call.1} parent=5 // pred_region
        %s162 = ssub.s32 %s15, 1
        %s163 = sand.u32 %s28, 1
        %s164 = scalar_lea.sflag [#allocation4], %s163
        %s165 = sand.u32 %s28, 1
        %s166 = smul.addr %s165, 64
        %s167 = scalar_lea.vmem [#allocation3], %s166
        // Predicated region
        $region33: #{tpu_custom_call.1} parent=31 // pred_check
          %p168 = pneg %p41
        $region34: #{tpu_custom_call.1} parent=31 // pred_check_branch
          %170 = sbr.rel (%p168) target = $region36
        $region35: #{tpu_custom_call.1} parent=31 // pred_region
          %171 = dma.done %s164, 1024
        $region36: #{tpu_custom_call.1} parent=31 // pred_fallthru
          _
        %s172 = sand.u32 %s28, 1
        %s173 = scalar_lea.sflag [#allocation4], %s172
        %s174 = sand.u32 %s28, 1
        %s175 = smul.addr %s174, 64
        %s176 = scalar_lea.vmem [#allocation3], %s175
        %p177 = pneg %p41
        %p178 = pneg %p38
        %p179 = pneg %p62
        %p180 = pneg %p59
        %p181 = pneg %p83
        %p182 = pneg %p80
        %p183 = pneg %p109
        %p184 = pneg %p106
        %s185 = sand.u32 %s96, 1
        %s186 = scalar_lea.sflag [#allocation5], %s185
        %s187 = sand.u32 %s96, 1
        %s188 = smul.addr %s187, 32
        %s189 = scalar_lea.vmem [#allocation6], %s188
        %s190 = smul.u32 4, %s20
        %s191 = smul.u32 4, %s20
        %v192 = vld [vmem:[%s167] sm:$0xff]
        %v193 = vld [vmem:[%s167 + $0x8] sm:$0xff]
        %vm194 = vcmask 7168
        %195 = vst.msk [vmem:[#allocation2] sm:$0xff] %vm194, 0.0
        %196 = vst.msk [vmem:[#allocation2 + $0x10] sm:$0xff] %vm194, 0.0
        %199 = vrot.lane.b32.xlu0 %v192, 1
        %v200 = vpop.permute.xlu0 %199
        %201 = vrot.lane.b32.xlu0 %v193, 1
        %v202 = vpop.permute.xlu0 %201
        %vm205 = vcmask 523272
        %206 = vst.msk [vmem:[#allocation2] sm:$0xff] %vm205, %v200
        %207 = vst.msk [vmem:[#allocation2 + $0x10] sm:$0xff] %vm205, %v202
        %vm208 = vcmask 523264
        %209 = vst.msk [vmem:[#allocation2 + $0x20] sm:$0xff] %vm208, %v192
        %210 = vst.msk [vmem:[#allocation2 + $0x30] sm:$0xff] %vm208, %v193
        %vm211 = vcmask 523768
        %212 = vst.msk [vmem:[#allocation2 + $0x40] sm:$0xff] %vm211, 0.0
        %213 = vst.msk [vmem:[#allocation2 + $0x50] sm:$0xff] %vm211, 0.0
        %214 = vrot.lane.b32.xlu0 %v192, 127
        %v215 = vpop.permute.xlu0 %214
        %216 = vrot.lane.b32.xlu0 %v193, 127
        %v217 = vpop.permute.xlu0 %216
        %vm220 = vcmask 515072
        %221 = vst.msk [vmem:[#allocation2 + $0x40] sm:$0xff] %vm220, %v215
        %222 = vst.msk [vmem:[#allocation2 + $0x50] sm:$0xff] %vm220, %v217
        %s223 = scalar_lea.vmem %s167, 16 [#allocation3]
        %v224 = vld [vmem:[%s223] sm:$0xff]
        %v225 = vld [vmem:[%s223 + $0x8] sm:$0xff]
        %vm226 = vcmask 531968
        %227 = vst.msk [vmem:[#allocation2] sm:$0xff] %vm226, 0.0
        %228 = vst.msk [vmem:[#allocation2 + $0x10] sm:$0xff] %vm226, 0.0
        %231 = vrot.lane.b32.xlu0 %v224, 65
        %v232 = vpop.permute.xlu0 %231
        %233 = vrot.lane.b32.xlu0 %v225, 65
        %v234 = vpop.permute.xlu0 %233
        %vm237 = vcmask 1048072
        %238 = vst.msk [vmem:[#allocation2] sm:$0xff] %vm237, %v232
        %239 = vst.msk [vmem:[#allocation2 + $0x10] sm:$0xff] %vm237, %v234
        %240 = vrot.lane.b32.xlu0 %v224, 64
        %v241 = vpop.permute.xlu0 %240
        %242 = vrot.lane.b32.xlu0 %v225, 64
        %v243 = vpop.permute.xlu0 %242
        %vm246 = vcmask 1048064
        %247 = vst.msk [vmem:[#allocation2 + $0x20] sm:$0xff] %vm246, %v241
        %248 = vst.msk [vmem:[#allocation2 + $0x30] sm:$0xff] %vm246, %v243
        %vm249 = vcmask 1048568
        %250 = vst.msk [vmem:[#allocation2 + $0x40] sm:$0xff] %vm249, 0.0
        %251 = vst.msk [vmem:[#allocation2 + $0x50] sm:$0xff] %vm249, 0.0
        %252 = vrot.lane.b32.xlu0 %v224, 63
        %v253 = vpop.permute.xlu0 %252
        %254 = vrot.lane.b32.xlu0 %v225, 63
        %v255 = vpop.permute.xlu0 %254
        %vm258 = vcmask 1039872
        %259 = vst.msk [vmem:[#allocation2 + $0x40] sm:$0xff] %vm258, %v253
        %260 = vst.msk [vmem:[#allocation2 + $0x50] sm:$0xff] %vm258, %v255
        %s261 = scalar_lea.vmem %s167, 32 [#allocation3]
        %v262 = vld [vmem:[%s261] sm:$0xff]
        %v263 = vld [vmem:[%s261 + $0x8] sm:$0xff]
        %264 = vst.msk [vmem:[#allocation2 + $0x8] sm:$0xff] %vm194, 0.0
        %265 = vst.msk [vmem:[#allocation2 + $0x18] sm:$0xff] %vm194, 0.0
        %268 = vrot.lane.b32.xlu0 %v262, 1
        %v269 = vpop.permute.xlu0 %268
        %270 = vrot.lane.b32.xlu0 %v263, 1
        %v271 = vpop.permute.xlu0 %270
        %274 = vst.msk [vmem:[#allocation2 + $0x8] sm:$0xff] %vm205, %v269
        %275 = vst.msk [vmem:[#allocation2 + $0x18] sm:$0xff] %vm205, %v271
        %276 = vst.msk [vmem:[#allocation2 + $0x28] sm:$0xff] %vm208, %v262
        %277 = vst.msk [vmem:[#allocation2 + $0x38] sm:$0xff] %vm208, %v263
        %278 = vst.msk [vmem:[#allocation2 + $0x48] sm:$0xff] %vm211, 0.0
        %279 = vst.msk [vmem:[#allocation2 + $0x58] sm:$0xff] %vm211, 0.0
        %280 = vrot.lane.b32.xlu0 %v262, 127
        %v281 = vpop.permute.xlu0 %280
        %282 = vrot.lane.b32.xlu0 %v263, 127
        %v283 = vpop.permute.xlu0 %282
        %286 = vst.msk [vmem:[#allocation2 + $0x48] sm:$0xff] %vm220, %v281
        %287 = vst.msk [vmem:[#allocation2 + $0x58] sm:$0xff] %vm220, %v283
        %s288 = scalar_lea.vmem %s167, 48 [#allocation3]
        %v289 = vld [vmem:[%s288] sm:$0xff]
        %v290 = vld [vmem:[%s288 + $0x8] sm:$0xff]
        %291 = vst.msk [vmem:[#allocation2 + $0x8] sm:$0xff] %vm226, 0.0
        %292 = vst.msk [vmem:[#allocation2 + $0x18] sm:$0xff] %vm226, 0.0
        %295 = vrot.lane.b32.xlu0 %v289, 65
        %v296 = vpop.permute.xlu0 %295
        %297 = vrot.lane.b32.xlu0 %v290, 65
        %v298 = vpop.permute.xlu0 %297
        %301 = vst.msk [vmem:[#allocation2 + $0x8] sm:$0xff] %vm237, %v296
        %302 = vst.msk [vmem:[#allocation2 + $0x18] sm:$0xff] %vm237, %v298
        %303 = vrot.lane.b32.xlu0 %v289, 64
        %v304 = vpop.permute.xlu0 %303
        %305 = vrot.lane.b32.xlu0 %v290, 64
        %v306 = vpop.permute.xlu0 %305
        %309 = vst.msk [vmem:[#allocation2 + $0x28] sm:$0xff] %vm246, %v304
        %310 = vst.msk [vmem:[#allocation2 + $0x38] sm:$0xff] %vm246, %v306
        %311 = vst.msk [vmem:[#allocation2 + $0x48] sm:$0xff] %vm249, 0.0
        %312 = vst.msk [vmem:[#allocation2 + $0x58] sm:$0xff] %vm249, 0.0
        %313 = vrot.lane.b32.xlu0 %v289, 63
        %v314 = vpop.permute.xlu0 %313
        %315 = vrot.lane.b32.xlu0 %v290, 63
        %v316 = vpop.permute.xlu0 %315
        %319 = vst.msk [vmem:[#allocation2 + $0x48] sm:$0xff] %vm258, %v314
        %320 = vst.msk [vmem:[#allocation2 + $0x58] sm:$0xff] %vm258, %v316
        %v321 = vld [vmem:[%s1] sm:$0xff]
        %v322 = vld [vmem:[%s1 + $0x8] sm:$0xff]
        %v323 = vld [vmem:[#allocation2] sm:$0xff]
        %v324 = vld [vmem:[#allocation2 + $0x8] sm:$0xff]
        %v325 = vld [vmem:[#allocation2 + $0x10] sm:$0xff]
        %v326 = vld [vmem:[#allocation2 + $0x18] sm:$0xff]
        %v327 = vld [vmem:[#allocation2 + $0x20] sm:$0xff]
        %v328 = vld [vmem:[#allocation2 + $0x28] sm:$0xff]
        %v329 = vld [vmem:[#allocation2 + $0x30] sm:$0xff]
        %v330 = vld [vmem:[#allocation2 + $0x38] sm:$0xff]
        %v331 = vld [vmem:[#allocation2 + $0x40] sm:$0xff]
        %v332 = vld [vmem:[#allocation2 + $0x48] sm:$0xff]
        %v333 = vld [vmem:[#allocation2 + $0x50] sm:$0xff]
        %v334 = vld [vmem:[#allocation2 + $0x58] sm:$0xff]
        %v335 = vld [vmem:[%s2] sm:$0xff]
        %v336 = vld [vmem:[%s2 + $0x8] sm:$0xff]
        %338 = vset.pattern.permute.xlu0 0
        %339 = vperm.xlu0 %338, %v335
        %v340 = vpop.permute.xlu0 %339
        %343 = vset.pattern.permute.xlu0 0
        %344 = vperm.xlu0 %343, %v336
        %v345 = vpop.permute.xlu0 %344
        %vm347 = vcmask 392192
        %v349 = vsel %vm347, %v321, 0
        %v352 = vsel %vm347, %v322, 0
        %354 = vmatprep.subr.mxu0 0.0
        %355 = vmatpush1.msra.mxu0 0.0
        %356 = vmatprep.subr.mxu0 0.0
        %357 = vmatpush1.msra.mxu0 0.0
        %358 = vmatprep.subr.mxu0 0.0
        %359 = vmatpush1.msra.mxu0 0.0
        %360 = vmatprep.subr.mxu0 0.0
        %361 = vmatpush1.msra.mxu0 0.0
        %362 = vmatprep.subr.mxu0 0.0
        %363 = vmatpush1.msra.mxu0 0.0
        %364 = vmatprep.subr.mxu0 0.0
        %365 = vmatpush1.msra.mxu0 0.0
        %366 = vmatprep.subr.mxu0 0.0
        %367 = vmatpush1.msra.mxu0 0.0
        %368 = vmatprep.subr.mxu0 0.0
        %369 = vmatpush1.msra.mxu0 0.0
        %370 = vmatprep.subr.mxu0 0.0
        %371 = vmatpush1.msra.mxu0 0.0
        %372 = vmatprep.subr.mxu0 0.0
        %373 = vmatpush1.msra.mxu0 0.0
        %374 = vmatprep.subr.mxu0 %v334
        %375 = vmatpush1.msra.mxu0 %v333
        %376 = vmatprep.subr.mxu0 %v332
        %377 = vmatpush1.msra.mxu0 %v331
        %378 = vmatprep.subr.mxu0 %v330
        %379 = vmatpush1.msra.mxu0 %v329
        %380 = vmatprep.subr.mxu0 %v328
        %381 = vmatpush1.msra.mxu0 %v327
        %382 = vmatprep.subr.mxu0 %v326
        %383 = vmatpush1.msra.mxu0 %v325
        %384 = vmatprep.subr.mxu0 %v324
        %385 = vmatpush1.msra.mxu0 %v323
        %386 = vmatprep.subr.mxu0 0.0
        %387 = vmatpush2.msra.mxu0 0.0
        %388 = vmatprep.subr.mxu0 0.0
        %389 = vmatpush2.msra.mxu0 0.0
        %390 = vmatprep.subr.mxu0 0.0
        %391 = vmatpush2.msra.mxu0 0.0
        %392 = vmatprep.subr.mxu0 0.0
        %393 = vmatpush2.msra.mxu0 0.0
        %394 = vmatprep.subr.mxu0 0.0
        %395 = vmatpush2.msra.mxu0 0.0
        %396 = vmatprep.subr.mxu0 0.0
        %397 = vmatpush2.msra.mxu0 0.0
        %398 = vmatprep.subr.mxu0 0.0
        %399 = vmatpush2.msra.mxu0 0.0
        %400 = vmatprep.subr.mxu0 0.0
        %401 = vmatpush2.msra.mxu0 0.0
        %402 = vmatprep.subr.mxu0 0.0
        %403 = vmatpush2.msra.mxu0 0.0
        %404 = vmatprep.subr.mxu0 0.0
        %405 = vmatpush2.msra.mxu0 0.0
        %406 = vmatprep.subr.mxu0 0.0
        %407 = vmatpush2.msra.mxu0 0.0
        %408 = vmatprep.subr.mxu0 0.0
        %409 = vmatpush2.msra.mxu0 0.0
        %410 = vmatprep.subr.mxu0 0.0
        %411 = vmatpush2.msra.mxu0 0.0
        %412 = vmatprep.subr.mxu0 0.0
        %413 = vmatpush2.msra.mxu0 0.0
        %414 = vmatprep.subr.mxu0 0.0
        %415 = vmatpush2.msra.mxu0 0.0
        %416 = vmatprep.subr.mxu0 0.0
        %417 = vmatpush2.msra.mxu0 0.0
        %418 = vmatprep.mubr.f32.mxu0 0.0
        %419 = vmatmul.mubr.f32.gmra.mxu0 %v349
        %v420 = vpop.f32.mrf.mxu0
        %v421 = vadd.f32 %v340, %v420
        %v422 = vpop.f32.mrf.mxu0
        %v423 = vadd.f32 %v340, %v422
        %424 = vmatprep.mubr.f32.mxu0 0.0
        %425 = vmatmul.mubr.f32.gmra.mxu0 %v352
        %v426 = vpop.f32.mrf.mxu0
        %v427 = vadd.f32 %v345, %v426
        %v428 = vpop.f32.mrf.mxu0
        %v429 = vadd.f32 %v345, %v428
        %430 = vdwg.mxu0
        %vm431 = vcmp.ge.f32.partialorder %v421, 0.0
        %vm432 = vcmp.ge.f32.partialorder %v423, 0.0
        %vm433 = vcmp.ge.f32.partialorder %v427, 0.0
        %vm434 = vcmp.ge.f32.partialorder %v429, 0.0
        %v435 = vmul.f32 %v421, 0.2
        %v436 = vmul.f32 %v423, 0.2
        %v437 = vmul.f32 %v427, 0.2
        %v438 = vmul.f32 %v429, 0.2
        %v439 = vsel %vm431, %v421, %v435
        %v440 = vsel %vm432, %v423, %v436
        %v441 = vsel %vm433, %v427, %v437
        %v442 = vsel %vm434, %v429, %v438
        %443 = vst.msk [vmem:[%s189] sm:$0xff] %vm208, %v439
        %445 = vrot.lane.b32.xlu0 %v441, 64
        %v446 = vpop.permute.xlu0 %445
        %448 = vst.msk [vmem:[%s189] sm:$0xff] %vm246, %v446
        %450 = vrot.lane.b32.xlu0 %v439, 64
        %v451 = vpop.permute.xlu0 %450
        %s453 = scalar_lea.vmem %s189, 8 [#allocation6]
        %454 = vst.msk [vmem:[%s453] sm:$0xff] %vm208, %v451
        %455 = vst.msk [vmem:[%s453] sm:$0xff] %vm246, %v441
        %s456 = scalar_lea.vmem %s189, 16 [#allocation6]
        %457 = vst.msk [vmem:[%s456] sm:$0xff] %vm208, %v440
        %459 = vrot.lane.b32.xlu0 %v442, 64
        %v460 = vpop.permute.xlu0 %459
        %462 = vst.msk [vmem:[%s456] sm:$0xff] %vm246, %v460
        %464 = vrot.lane.b32.xlu0 %v440, 64
        %v465 = vpop.permute.xlu0 %464
        %s467 = scalar_lea.vmem %s189, 24 [#allocation6]
        %468 = vst.msk [vmem:[%s467] sm:$0xff] %vm208, %v465
        %469 = vst.msk [vmem:[%s467] sm:$0xff] %vm246, %v442
        %s470 = sand.u32 %s96, 1
        %s471 = scalar_lea.sflag [#allocation5], %s470
        %s472 = sand.u32 %s96, 1
        %s473 = smul.addr %s472, 32
        %s474 = scalar_lea.vmem [#allocation6], %s473
        // Predicated region
        $region37: #{tpu_custom_call.1} parent=31 // pred_check
          %p475 = pneg %p106
        $region38: #{tpu_custom_call.1} parent=31 // pred_check_branch
          %477 = sbr.rel (%p475) target = $region40
        $region39: #{tpu_custom_call.1} parent=31 // pred_region
          %s478 = smul.u32 4, %s20
          %s480 = ssub.s32 512, 512
          %481 = vsyncadd %s471, %s480
          %s482 = smul.addr %s478, 128
          %s483 = scalar_lea.hbm %s3, %s482
          %s484 = sshll.u32 %s474, 4
          %s485 = int_to_ptr.vmem [resolvable:$true] %s484
          %490 = dma.vmem_to_hbm [thread:$0]  %s485, 512, %s483, %s471, 128, 128, 8
        $region40: #{tpu_custom_call.1} parent=31 // pred_fallthru
          _
      $region32: #{tpu_custom_call.1} parent=5 // pred_fallthru
        _
      %p491 = scmp.le.s32.totalorder 2, %s15
      // Predicated region
      $region41: #{tpu_custom_call.1} parent=5 // pred_check
        %p492 = pneg %p491
      $region42: #{tpu_custom_call.1} parent=5 // pred_check_branch
        %494 = sbr.rel (%p492) target = $region44
      $region43: #{tpu_custom_call.1} parent=5 // pred_region
        %s495 = ssub.s32 %s15, 2
        // Predicated region
        $region45: #{tpu_custom_call.1} parent=43 // pred_check
          %p496 = pneg %p112
        $region46: #{tpu_custom_call.1} parent=43 // pred_check_branch
          %498 = sbr.rel (%p496) target = $region48
        $region47: #{tpu_custom_call.1} parent=43 // pred_region
          %s499 = sand.u32 %s97, 1
          %s500 = scalar_lea.sflag [#allocation5], %s499
          %s501 = sand.u32 %s97, 1
          %s502 = smul.addr %s501, 32
          %s503 = scalar_lea.vmem [#allocation6], %s502
          %504 = dma.done %s500, 512
        $region48: #{tpu_custom_call.1} parent=43 // pred_fallthru
          _
      $region44: #{tpu_custom_call.1} parent=5 // pred_fallthru
        _
    $region6: #{tpu_custom_call.1} parent=1 // loop_footer
      %s19 = sadd.s32 1, %s15
    $region7: #{tpu_custom_call.1} parent=1 // loop_footer_branch
      %14 = sbr.rel target = $region3
    $region8: #{tpu_custom_call.1} parent=1 // loop_exit
      _
    %505 = vsyncpa [#allocation4], 1
    %s506 = scalar_lea.sflag [#allocation4], 1
    %507 = vsyncpa %s506, 1
    %508 = vsyncpa [#allocation5], 1
    %s509 = scalar_lea.sflag [#allocation5], 1
    %510 = vsyncpa %s509, 1

</llo_original>
